<compile_context>
chip_gen: v5e
topology: v5e:2x2
jax: 0.10.0
libtpu: 0.0.40
codegen_flags: <defaults>
</compile_context>

<pallas_src>
import functools
import math

import jax
import jax.numpy as jnp
from jax.experimental import pallas as pl
from jax.experimental.pallas import tpu as pltpu

_NEG_INF = -1e30   # large finite negative, Python float (no inf-inf NaNs, no captured consts)


def _layernorm(v, g, b, eps=1e-5):
    mu = jnp.mean(v, axis=-1, keepdims=True)
    var = jnp.mean((v - mu) ** 2, axis=-1, keepdims=True)
    return (v - mu) * jax.lax.rsqrt(var + eps) * g + b


def _gelu_tanh(x):
    # nn.GELU(approximate='tanh')
    c = math.sqrt(2.0 / math.pi)
    return 0.5 * x * (1.0 + jnp.tanh(c * (x + 0.044715 * x * x * x)))


# ---------------------------------------------------------------------------
# kernel 1: h = LN1(x) ; qkv = h @ Wqkv + b ; in-kernel head split
#           grid = (B, T // tq)
# ---------------------------------------------------------------------------
def ln_qkv_kernel(x_ref, g_ref, b_ref, w_ref, bias_ref,
                  q_ref, k_ref, v_ref, *, n_head, compute_dtype):
    x = x_ref[0]                                               # (tq, C) f32
    h = _layernorm(x, g_ref[...], b_ref[...])
    qkv = jnp.dot(h.astype(compute_dtype), w_ref[...],
                  preferred_element_type=jnp.float32) + bias_ref[...]
    qkv = qkv.astype(q_ref.dtype)                              # (tq, 3C)
    C = x.shape[-1]
    HD = C // n_head
    # static lane slices -> Q/K/V leave the kernel already head-major
    for hh in range(n_head):
        q_ref[0, hh] = qkv[:, hh * HD:(hh + 1) * HD]
        k_ref[0, hh] = qkv[:, C + hh * HD:C + (hh + 1) * HD]
        v_ref[0, hh] = qkv[:, 2 * C + hh * HD:2 * C + (hh + 1) * HD]


# ---------------------------------------------------------------------------
# kernel 2: flash attention (heads batched) + c_proj + residual + LN2 + MLP
#           grid = (B, T // tq, T // tk), kv axis is the reduction axis.
# ---------------------------------------------------------------------------
def attn_mlp_kernel(x_ref, q_ref, k_ref, v_ref,
                    wpr_ref, bpr_ref, ln2g_ref, ln2b_ref,
                    wfc_ref, bfc_ref, wpj_ref, bpj_ref,
                    out_ref,
                    m_ref, l_ref, acc_ref, *, compute_dtype):
    qi = pl.program_id(1)
    ki = pl.program_id(2)
    nk = pl.num_programs(2)

    H, TQ, HD = q_ref.shape[1], q_ref.shape[2], q_ref.shape[3]
    TK = k_ref.shape[2]
    scale = 1.0 / math.sqrt(HD)
    exact = jnp.dtype(compute_dtype) == jnp.dtype(jnp.float32)

    @pl.when(ki == 0)
    def _init():
        m_ref[...] = jnp.full(m_ref.shape, _NEG_INF, m_ref.dtype)
        l_ref[...] = jnp.zeros(l_ref.shape, l_ref.dtype)
        acc_ref[...] = jnp.zeros(acc_ref.shape, acc_ref.dtype)

    def _accumulate(apply_mask):
        q = q_ref[0]                                           # (H, TQ, HD)
        k = k_ref[0]                                           # (H, TK, HD)
        v = v_ref[0]                                           # (H, TK, HD)

        s = jnp.einsum('hqd,hkd->hqk', q, k,
                       preferred_element_type=jnp.float32) * scale       # (H, TQ, TK)
        if apply_mask:                                         # diagonal tiles only
            row = qi * TQ + jax.lax.broadcasted_iota(jnp.int32, (TQ, TK), 0)
            col = ki * TK + jax.lax.broadcasted_iota(jnp.int32, (TQ, TK), 1)
            s = jnp.where((row >= col)[None, :, :], s, _NEG_INF)

        m_prev = m_ref[...]                                    # (H, TQ, 1)
        m_new = jnp.maximum(m_prev, jnp.max(s, axis=-1, keepdims=True))
        alpha = jnp.exp(m_prev - m_new)
        # probabilities in compute_dtype (bf16 EUP/MXU path); denominator in f32
        p = jnp.exp((s - m_new).astype(compute_dtype))         # (H, TQ, TK)
        l_ref[...] = alpha * l_ref[...] + jnp.sum(p.astype(jnp.float32),
                                                  axis=-1, keepdims=True)
        acc_ref[...] = alpha * acc_ref[...] + jnp.einsum(
            'hqk,hkd->hqd', p, v, preferred_element_type=jnp.float32)
        m_ref[...] = m_new

    in_range = ki * TK <= qi * TQ + (TQ - 1)      # tile not entirely above the diagonal
    needs_mask = (ki + 1) * TK > qi * TQ + 1      # tile straddles the diagonal

    @pl.when(jnp.logical_and(in_range, needs_mask))
    def _acc_masked():
        _accumulate(True)

    @pl.when(jnp.logical_and(in_range, jnp.logical_not(needs_mask)))
    def _acc_unmasked():
        _accumulate(False)

    @pl.when(ki == nk - 1)
    def _finalize():
        x = x_ref[0]                                                      # (TQ, C) f32
        inv_l = pl.reciprocal(l_ref[...], approx=not exact)               # (H, TQ, 1)
        y = (acc_ref[...] * inv_l).astype(compute_dtype)                  # (H, TQ, HD)
        # head merge -> single (TQ, C) @ (C, C) matmul (full MXU contraction over C)
        y2 = jnp.concatenate([y[h] for h in range(H)], axis=-1)           # (TQ, C)
        attn_out = jnp.dot(y2, wpr_ref[...],
                           preferred_element_type=jnp.float32) + bpr_ref[...]
        x1 = x + attn_out

        h2 = _layernorm(x1, ln2g_ref[...], ln2b_ref[...])
        f = jnp.dot(h2.astype(compute_dtype), wfc_ref[...],
                    preferred_element_type=jnp.float32) + bfc_ref[...]
        g = _gelu_tanh(f)
        mlp_out = jnp.dot(g.astype(compute_dtype), wpj_ref[...],
                          preferred_element_type=jnp.float32) + bpj_ref[...]
        out_ref[0] = (x1 + mlp_out).astype(out_ref.dtype)


def _device_kind():
    try:
        return jax.devices()[0].device_kind.lower()
    except Exception:
        return ""


def gpt2_block(x, params, n_head, *, compute_dtype=jnp.bfloat16,
               q_tile=None, kv_tile=None, single_buffer_weights=True):
    (ln1g, ln1b, wqkv, bqkv, wpr, bpr,
     ln2g, ln2b, wfc, bfc, wpj, bpj) = params
    B, T, C = x.shape
    H = n_head
    assert C % H == 0
    HD = C // H

    kind = _device_kind()
    is_v5e = ("v5 lite" in kind) or ("v5e" in kind)
    is_v7 = "v7" in kind
    # v6e/v7x MXUs are 2x256^2 -> 256-wide tiles; v5e's 128^2 MXU is full at 128.
    default_tile = 128 if is_v5e else 256
    tq = q_tile if q_tile is not None else min(T, default_tile)
    tk = kv_tile if kv_tile is not None else min(T, default_tile)
    assert T % tq == 0 and T % tk == 0, "T must be divisible by the tile sizes"

    cd = jnp.dtype(compute_dtype)
    wqkv_c = wqkv.astype(cd)
    wpr_c = wpr.astype(cd)
    wfc_c = wfc.astype(cd)
    wpj_c = wpj.astype(cd)

    # Constant-index weight/bias specs: DMA'd once per call; single-buffered
    # (the block never changes, so a second pipeline buffer is pure VMEM waste).
    w_kwargs = {"pipeline_mode": pl.Buffered(1)} if single_buffer_weights else {}

    def const_spec2(shape):
        return pl.BlockSpec(shape, lambda b, i: (0,) * len(shape), **w_kwargs)

    def const_spec3(shape):
        return pl.BlockSpec(shape, lambda b, i, j: (0,) * len(shape), **w_kwargs)

    # -------- kernel 1: LN1 + QKV projection + head split --------
    qkv_spec = pl.BlockSpec((1, H, tq, HD), lambda b, i: (b, 0, i, 0))
    q, k, v = pl.pallas_call(
        functools.partial(ln_qkv_kernel, n_head=H, compute_dtype=cd),
        out_shape=tuple(jax.ShapeDtypeStruct((B, H, T, HD), cd) for _ in range(3)),
        grid_spec=pltpu.PrefetchScalarGridSpec(
            num_scalar_prefetch=0,
            grid=(B, T // tq),
            in_specs=[
                pl.BlockSpec((1, tq, C), lambda b, i: (b, i, 0)),   # x
                const_spec2((1, C)),                                # ln1 gamma
                const_spec2((1, C)),                                # ln1 beta
                const_spec2((C, 3 * C)),                            # Wqkv
                const_spec2((1, 3 * C)),                            # bqkv
            ],
            out_specs=[qkv_spec, qkv_spec, qkv_spec],
        ),
        compiler_params=pltpu.CompilerParams(
            dimension_semantics=("parallel", "parallel")),
    )(x, ln1g, ln1b, wqkv_c, bqkv)

    # K/V index maps clamped to the last causally-needed kv block: above-diagonal
    # steps repeat the previous block index so Pallas skips their DMA entirely.
    def kv_index_map(b, i, j):
        last_needed = ((i + 1) * tq - 1) // tk
        return (b, 0, jnp.minimum(j, last_needed), 0)

    # Rough resident-VMEM footprint -> vmem limit, capped per generation
    # (v7x only has 64 MiB physical per TensorCore: never request all of it).
    cdb = cd.itemsize
    weight_bytes = (C * C + 2 * C * 4 * C) * cdb + 8 * C * 4
    if not single_buffer_weights:
        weight_bytes *= 2
    act_bytes = 2 * (2 * tq * C * 4 + H * tq * HD * cdb + 2 * H * tk * HD * cdb)
    scratch_bytes = 2 * H * tq * 128 * 4 + H * tq * HD * 4     # m/l lane-padded to 128
    footprint = weight_bytes + act_bytes + scratch_bytes
    vmem_cap = (56 if is_v7 else 100) * 1024 * 1024
    vmem_limit = int(min(max(2 * footprint, 32 * 1024 * 1024), vmem_cap))
    # TODO(synk): for C >~ 1280 split LN2+MLP into a third pallas_call that tiles
    # Wfc/Wpj over the 4C hidden dim so resident weights fit v7x's 64 MiB VMEM.

    # -------- kernel 2: flash attention + projection + residuals + LN2 + MLP --------
    out = pl.pallas_call(
        functools.partial(attn_mlp_kernel, compute_dtype=cd),
        out_shape=jax.ShapeDtypeStruct((B, T, C), x.dtype),
        grid_spec=pltpu.PrefetchScalarGridSpec(
            num_scalar_prefetch=0,
            grid=(B, T // tq, T // tk),
            in_specs=[
                pl.BlockSpec((1, tq, C), lambda b, i, j: (b, i, 0)),         # x (residual)
                pl.BlockSpec((1, H, tq, HD), lambda b, i, j: (b, 0, i, 0)),  # q
                pl.BlockSpec((1, H, tk, HD), kv_index_map),                  # k (clamped)
                pl.BlockSpec((1, H, tk, HD), kv_index_map),                  # v (clamped)
                const_spec3((C, C)),                                         # Wproj
                const_spec3((1, C)),                                         # bproj
                const_spec3((1, C)),                                         # ln2 gamma
                const_spec3((1, C)),                                         # ln2 beta
                const_spec3((C, 4 * C)),                                     # Wfc
                const_spec3((1, 4 * C)),                                     # bfc
                const_spec3((4 * C, C)),                                     # Wmlp_proj
                const_spec3((1, C)),                                         # bmlp_proj
            ],
            out_specs=pl.BlockSpec((1, tq, C), lambda b, i, j: (b, i, 0)),
            scratch_shapes=[
                # (H, tq, 1) pads the lane axis to 128 -- accepted knowingly: the
                # lane-broadcast layout keeps per-kv-step rescales cheap.
                pltpu.VMEM((H, tq, 1), jnp.float32),    # running max
                pltpu.VMEM((H, tq, 1), jnp.float32),    # running denominator
                pltpu.VMEM((H, tq, HD), jnp.float32),   # output accumulator
            ],
        ),
        compiler_params=pltpu.CompilerParams(
            dimension_semantics=("parallel", "parallel", "arbitrary"),
            vmem_limit_bytes=vmem_limit),
    )(x, q, k, v, wpr_c, bpr, ln2g, ln2b, wfc_c, bfc, wpj_c, bpj)
    return out


def _run_block(*args, **kwargs):
    """Run gpt2_block; if this build rejects pipeline_mode=pl.Buffered on the
    constant weight BlockSpecs, retry with default (double-buffered) weights."""
    try:
        return gpt2_block(*args, **kwargs)
    except Exception:
        return gpt2_block(*args, single_buffer_weights=False, **kwargs)


# ---------------- pure-JAX reference (mirrors the PyTorch forward) ----------------
def ref_block(x, params, n_head):
    ln1g, ln1b, wqkv, bqkv, wpr, bpr, ln2g, ln2b, wfc, bfc, wpj, bpj = params
    B, T, C = x.shape
    hd = C // n_head

    def ln(v, g, b):
        mu = v.mean(-1, keepdims=True)
        var = ((v - mu) ** 2).mean(-1, keepdims=True)
        return (v - mu) / jnp.sqrt(var + 1e-5) * g + b

    h = ln(x, ln1g, ln1b)
    qkv = h @ wqkv + bqkv
    q, k, v = jnp.split(qkv, 3, axis=-1)
    q = q.reshape(B, T, n_head, hd).transpose(0, 2, 1, 3)
    k = k.reshape(B, T, n_head, hd).transpose(0, 2, 1, 3)
    v = v.reshape(B, T, n_head, hd).transpose(0, 2, 1, 3)
    att = (q @ jnp.swapaxes(k, -2, -1)) * (1.0 / math.sqrt(hd))
    mask = jnp.tril(jnp.ones((T, T), dtype=bool))
    att = jnp.where(mask, att, -jnp.inf)
    att = jax.nn.softmax(att, axis=-1)
    y = (att @ v).transpose(0, 2, 1, 3).reshape(B, T, C)
    x1 = x + y @ wpr + bpr
    h2 = ln(x1, ln2g, ln2b)
    f = h2 @ wfc + bfc
    g = 0.5 * f * (1.0 + jnp.tanh(math.sqrt(2.0 / math.pi) * (f + 0.044715 * f ** 3)))
    return x1 + g @ wpj + bpj


if __name__ == "__main__":
    B, T, C, N_HEAD = 2, 16, 32, 4     # block_size == T == 16, n_embd == 32, n_head == 4

    key = jax.random.PRNGKey(0)
    ks = jax.random.split(key, 8)
    std = 0.02

    x = jax.random.normal(ks[0], (B, T, C), dtype=jnp.float32)

    # LayerNorm params (PyTorch default init: weight=1, bias=0)
    ln1g = jnp.ones((1, C), jnp.float32)
    ln1b = jnp.zeros((1, C), jnp.float32)
    ln2g = jnp.ones((1, C), jnp.float32)
    ln2b = jnp.zeros((1, C), jnp.float32)

    # Linear weights stored as (in_features, out_features) = torch W.T
    wqkv = std * jax.random.normal(ks[1], (C, 3 * C), jnp.float32)
    bqkv = std * jax.random.normal(ks[2], (1, 3 * C), jnp.float32)
    wpr = std * jax.random.normal(ks[3], (C, C), jnp.float32)
    bpr = std * jax.random.normal(ks[4], (1, C), jnp.float32)
    wfc = std * jax.random.normal(ks[5], (C, 4 * C), jnp.float32)
    bfc = std * jax.random.normal(ks[6], (1, 4 * C), jnp.float32)
    wpj = std * jax.random.normal(ks[7], (4 * C, C), jnp.float32)
    bpj = jnp.zeros((1, C), jnp.float32)

    params = (ln1g, ln1b, wqkv, bqkv, wpr, bpr, ln2g, ln2b, wfc, bfc, wpj, bpj)

    expected = ref_block(x, params, N_HEAD)

    # f32 path with small tiles -> exercises multi-tile online-softmax accumulation,
    # the causal kv-tile skip and the clamped K/V index maps (grid = (2, 2, 2)).
    out_f32 = _run_block(x, params, N_HEAD, compute_dtype=jnp.float32,
                         q_tile=8, kv_tile=8)
    out_f32 = jax.block_until_ready(out_f32)
    assert out_f32.shape == (B, T, C)
    assert jnp.allclose(out_f32, expected, atol=2e-3, rtol=2e-3), "f32 mismatch vs reference"

    # bf16 matmul-operand path (f32 accumulation), full-T tiles at this toy size.
    out_bf16 = _run_block(x, params, N_HEAD, compute_dtype=jnp.bfloat16)
    out_bf16 = jax.block_until_ready(out_bf16)
    assert jnp.allclose(out_bf16, expected, atol=5e-2, rtol=5e-2), "bf16 mismatch vs reference"

    print("KERNEL_OK")
</pallas_src>

<mosaic_0001>
module attributes {stable_mosaic.version = 11 : i64} {
  func.func @ln_qkv_kernel(%arg0: i32, %arg1: i32, %arg2: memref<1x8x32xf32, #tpu.memory_space<vmem>>, %arg3: memref<1x32xf32, #tpu.memory_space<vmem>>, %arg4: memref<1x32xf32, #tpu.memory_space<vmem>>, %arg5: memref<32x96xf32, #tpu.memory_space<vmem>>, %arg6: memref<1x96xf32, #tpu.memory_space<vmem>>, %arg7: memref<1x4x8x8xf32, #tpu.memory_space<vmem>>, %arg8: memref<1x4x8x8xf32, #tpu.memory_space<vmem>>, %arg9: memref<1x4x8x8xf32, #tpu.memory_space<vmem>>) attributes {dimension_semantics = [#tpu.dimension_semantics<parallel>, #tpu.dimension_semantics<parallel>], iteration_bounds = array<i64: 2, 2>, scalar_prefetch = 0 : i64, scratch_operands = 0 : i64, tpu.core_type = #tpu.core_type<tc>, window_params = [{transform_indices = @transform_0, window_bounds = array<i64: 1, 8, 32>}, {pipeline_mode = #tpu.pipeline_mode<synchronous>, transform_indices = @transform_1, window_bounds = array<i64: 1, 32>}, {pipeline_mode = #tpu.pipeline_mode<synchronous>, transform_indices = @transform_2, window_bounds = array<i64: 1, 32>}, {pipeline_mode = #tpu.pipeline_mode<synchronous>, transform_indices = @transform_3, window_bounds = array<i64: 32, 96>}, {pipeline_mode = #tpu.pipeline_mode<synchronous>, transform_indices = @transform_4, window_bounds = array<i64: 1, 96>}, {transform_indices = @transform_5, window_bounds = array<i64: 1, 4, 8, 8>}, {transform_indices = @transform_6, window_bounds = array<i64: 1, 4, 8, 8>}, {transform_indices = @transform_7, window_bounds = array<i64: 1, 4, 8, 8>}]} {
    %c0 = arith.constant 0 : index
    %c0_0 = arith.constant 0 : index
    %c0_1 = arith.constant 0 : index
    %0 = vector.load %arg2[%c0, %c0_0, %c0_1] : memref<1x8x32xf32, #tpu.memory_space<vmem>>, vector<1x8x32xf32>
    %1 = vector.shape_cast %0 : vector<1x8x32xf32> to vector<8x32xf32>
    %c0_2 = arith.constant 0 : index
    %c0_3 = arith.constant 0 : index
    %2 = vector.load %arg3[%c0_2, %c0_3] : memref<1x32xf32, #tpu.memory_space<vmem>>, vector<1x32xf32>
    %c0_4 = arith.constant 0 : index
    %c0_5 = arith.constant 0 : index
    %3 = vector.load %arg4[%c0_4, %c0_5] : memref<1x32xf32, #tpu.memory_space<vmem>>, vector<1x32xf32>
    %cst = arith.constant dense<0.000000e+00> : vector<8xf32>
    %4 = vector.multi_reduction <add>, %1, %cst [1] : vector<8x32xf32> to vector<8xf32>
    %5 = vector.shape_cast %4 : vector<8xf32> to vector<8x1xf32>
    %cst_6 = arith.constant 3.200000e+01 : f32
    %6 = vector.broadcast %cst_6 : f32 to vector<8x1xf32>
    %7 = arith.divf %5, %6 : vector<8x1xf32>
    %8 = vector.broadcast %7 : vector<8x1xf32> to vector<8x32xf32>
    %9 = arith.subf %1, %8 : vector<8x32xf32>
    %10 = arith.mulf %9, %9 : vector<8x32xf32>
    %cst_7 = arith.constant dense<0.000000e+00> : vector<8xf32>
    %11 = vector.multi_reduction <add>, %10, %cst_7 [1] : vector<8x32xf32> to vector<8xf32>
    %12 = vector.shape_cast %11 : vector<8xf32> to vector<8x1xf32>
    %cst_8 = arith.constant 3.200000e+01 : f32
    %13 = vector.broadcast %cst_8 : f32 to vector<8x1xf32>
    %14 = arith.divf %12, %13 : vector<8x1xf32>
    %15 = vector.broadcast %7 : vector<8x1xf32> to vector<8x32xf32>
    %16 = arith.subf %1, %15 : vector<8x32xf32>
    %cst_9 = arith.constant 9.99999974E-6 : f32
    %17 = vector.broadcast %cst_9 : f32 to vector<8x1xf32>
    %18 = arith.addf %14, %17 : vector<8x1xf32>
    %19 = math.rsqrt %18 : vector<8x1xf32>
    %20 = vector.broadcast %19 : vector<8x1xf32> to vector<8x32xf32>
    %21 = arith.mulf %16, %20 : vector<8x32xf32>
    %22 = vector.broadcast %2 : vector<1x32xf32> to vector<8x32xf32>
    %23 = arith.mulf %21, %22 : vector<8x32xf32>
    %24 = vector.broadcast %3 : vector<1x32xf32> to vector<8x32xf32>
    %25 = arith.addf %23, %24 : vector<8x32xf32>
    %c0_10 = arith.constant 0 : index
    %c0_11 = arith.constant 0 : index
    %26 = vector.load %arg5[%c0_10, %c0_11] : memref<32x96xf32, #tpu.memory_space<vmem>>, vector<32x96xf32>
    %cst_12 = arith.constant dense<0.000000e+00> : vector<8x96xf32>
    %27 = tpu.matmul %25, %26, %cst_12 {dimension_numbers = #tpu.dot_dimension_numbers<[1], [0], [0], [1], [0, 0, 1, 1], [], []>} : vector<8x32xf32>, vector<32x96xf32>, vector<8x96xf32> -> vector<8x96xf32>
    %c0_13 = arith.constant 0 : index
    %c0_14 = arith.constant 0 : index
    %28 = vector.load %arg6[%c0_13, %c0_14] : memref<1x96xf32, #tpu.memory_space<vmem>>, vector<1x96xf32>
    %29 = vector.broadcast %28 : vector<1x96xf32> to vector<8x96xf32>
    %30 = arith.addf %27, %29 : vector<8x96xf32>
    %31 = vector.extract_strided_slice %30 {offsets = [0, 0], sizes = [8, 8], strides = [1, 1]} : vector<8x96xf32> to vector<8x8xf32>
    %c0_15 = arith.constant 0 : index
    %c0_16 = arith.constant 0 : index
    %c0_17 = arith.constant 0 : index
    %c0_18 = arith.constant 0 : index
    %32 = vector.load %arg7[%c0_15, %c0_16, %c0_17, %c0_18] : memref<1x4x8x8xf32, #tpu.memory_space<vmem>>, vector<1x1x8x8xf32>
    %33 = vector.shape_cast %32 : vector<1x1x8x8xf32> to vector<8x8xf32>
    %34 = vector.shape_cast %31 : vector<8x8xf32> to vector<1x1x8x8xf32>
    tpu.vector_store %arg7[%c0_15, %c0_16, %c0_17, %c0_18], %34 {strides = array<i32>} : memref<1x4x8x8xf32, #tpu.memory_space<vmem>>, vector<1x1x8x8xf32>,
    %35 = vector.extract_strided_slice %30 {offsets = [0, 32], sizes = [8, 8], strides = [1, 1]} : vector<8x96xf32> to vector<8x8xf32>
    %c0_19 = arith.constant 0 : index
    %c0_20 = arith.constant 0 : index
    %c0_21 = arith.constant 0 : index
    %c0_22 = arith.constant 0 : index
    %36 = vector.load %arg8[%c0_19, %c0_20, %c0_21, %c0_22] : memref<1x4x8x8xf32, #tpu.memory_space<vmem>>, vector<1x1x8x8xf32>
    %37 = vector.shape_cast %36 : vector<1x1x8x8xf32> to vector<8x8xf32>
    %38 = vector.shape_cast %35 : vector<8x8xf32> to vector<1x1x8x8xf32>
    tpu.vector_store %arg8[%c0_19, %c0_20, %c0_21, %c0_22], %38 {strides = array<i32>} : memref<1x4x8x8xf32, #tpu.memory_space<vmem>>, vector<1x1x8x8xf32>,
    %39 = vector.extract_strided_slice %30 {offsets = [0, 64], sizes = [8, 8], strides = [1, 1]} : vector<8x96xf32> to vector<8x8xf32>
    %c0_23 = arith.constant 0 : index
    %c0_24 = arith.constant 0 : index
    %c0_25 = arith.constant 0 : index
    %c0_26 = arith.constant 0 : index
    %40 = vector.load %arg9[%c0_23, %c0_24, %c0_25, %c0_26] : memref<1x4x8x8xf32, #tpu.memory_space<vmem>>, vector<1x1x8x8xf32>
    %41 = vector.shape_cast %40 : vector<1x1x8x8xf32> to vector<8x8xf32>
    %42 = vector.shape_cast %39 : vector<8x8xf32> to vector<1x1x8x8xf32>
    tpu.vector_store %arg9[%c0_23, %c0_24, %c0_25, %c0_26], %42 {strides = array<i32>} : memref<1x4x8x8xf32, #tpu.memory_space<vmem>>, vector<1x1x8x8xf32>,
    %43 = vector.extract_strided_slice %30 {offsets = [0, 8], sizes = [8, 8], strides = [1, 1]} : vector<8x96xf32> to vector<8x8xf32>
    %c0_27 = arith.constant 0 : index
    %c1 = arith.constant 1 : index
    %c0_28 = arith.constant 0 : index
    %c0_29 = arith.constant 0 : index
    %44 = vector.load %arg7[%c0_27, %c1, %c0_28, %c0_29] : memref<1x4x8x8xf32, #tpu.memory_space<vmem>>, vector<1x1x8x8xf32>
    %45 = vector.shape_cast %44 : vector<1x1x8x8xf32> to vector<8x8xf32>
    %46 = vector.shape_cast %43 : vector<8x8xf32> to vector<1x1x8x8xf32>
    tpu.vector_store %arg7[%c0_27, %c1, %c0_28, %c0_29], %46 {strides = array<i32>} : memref<1x4x8x8xf32, #tpu.memory_space<vmem>>, vector<1x1x8x8xf32>,
    %47 = vector.extract_strided_slice %30 {offsets = [0, 40], sizes = [8, 8], strides = [1, 1]} : vector<8x96xf32> to vector<8x8xf32>
    %c0_30 = arith.constant 0 : index
    %c1_31 = arith.constant 1 : index
    %c0_32 = arith.constant 0 : index
    %c0_33 = arith.constant 0 : index
    %48 = vector.load %arg8[%c0_30, %c1_31, %c0_32, %c0_33] : memref<1x4x8x8xf32, #tpu.memory_space<vmem>>, vector<1x1x8x8xf32>
    %49 = vector.shape_cast %48 : vector<1x1x8x8xf32> to vector<8x8xf32>
    %50 = vector.shape_cast %47 : vector<8x8xf32> to vector<1x1x8x8xf32>
    tpu.vector_store %arg8[%c0_30, %c1_31, %c0_32, %c0_33], %50 {strides = array<i32>} : memref<1x4x8x8xf32, #tpu.memory_space<vmem>>, vector<1x1x8x8xf32>,
    %51 = vector.extract_strided_slice %30 {offsets = [0, 72], sizes = [8, 8], strides = [1, 1]} : vector<8x96xf32> to vector<8x8xf32>
    %c0_34 = arith.constant 0 : index
    %c1_35 = arith.constant 1 : index
    %c0_36 = arith.constant 0 : index
    %c0_37 = arith.constant 0 : index
    %52 = vector.load %arg9[%c0_34, %c1_35, %c0_36, %c0_37] : memref<1x4x8x8xf32, #tpu.memory_space<vmem>>, vector<1x1x8x8xf32>
    %53 = vector.shape_cast %52 : vector<1x1x8x8xf32> to vector<8x8xf32>
    %54 = vector.shape_cast %51 : vector<8x8xf32> to vector<1x1x8x8xf32>
    tpu.vector_store %arg9[%c0_34, %c1_35, %c0_36, %c0_37], %54 {strides = array<i32>} : memref<1x4x8x8xf32, #tpu.memory_space<vmem>>, vector<1x1x8x8xf32>,
    %55 = vector.extract_strided_slice %30 {offsets = [0, 16], sizes = [8, 8], strides = [1, 1]} : vector<8x96xf32> to vector<8x8xf32>
    %c0_38 = arith.constant 0 : index
    %c2 = arith.constant 2 : index
    %c0_39 = arith.constant 0 : index
    %c0_40 = arith.constant 0 : index
    %56 = vector.load %arg7[%c0_38, %c2, %c0_39, %c0_40] : memref<1x4x8x8xf32, #tpu.memory_space<vmem>>, vector<1x1x8x8xf32>
    %57 = vector.shape_cast %56 : vector<1x1x8x8xf32> to vector<8x8xf32>
    %58 = vector.shape_cast %55 : vector<8x8xf32> to vector<1x1x8x8xf32>
    tpu.vector_store %arg7[%c0_38, %c2, %c0_39, %c0_40], %58 {strides = array<i32>} : memref<1x4x8x8xf32, #tpu.memory_space<vmem>>, vector<1x1x8x8xf32>,
    %59 = vector.extract_strided_slice %30 {offsets = [0, 48], sizes = [8, 8], strides = [1, 1]} : vector<8x96xf32> to vector<8x8xf32>
    %c0_41 = arith.constant 0 : index
    %c2_42 = arith.constant 2 : index
    %c0_43 = arith.constant 0 : index
    %c0_44 = arith.constant 0 : index
    %60 = vector.load %arg8[%c0_41, %c2_42, %c0_43, %c0_44] : memref<1x4x8x8xf32, #tpu.memory_space<vmem>>, vector<1x1x8x8xf32>
    %61 = vector.shape_cast %60 : vector<1x1x8x8xf32> to vector<8x8xf32>
    %62 = vector.shape_cast %59 : vector<8x8xf32> to vector<1x1x8x8xf32>
    tpu.vector_store %arg8[%c0_41, %c2_42, %c0_43, %c0_44], %62 {strides = array<i32>} : memref<1x4x8x8xf32, #tpu.memory_space<vmem>>, vector<1x1x8x8xf32>,
    %63 = vector.extract_strided_slice %30 {offsets = [0, 80], sizes = [8, 8], strides = [1, 1]} : vector<8x96xf32> to vector<8x8xf32>
    %c0_45 = arith.constant 0 : index
    %c2_46 = arith.constant 2 : index
    %c0_47 = arith.constant 0 : index
    %c0_48 = arith.constant 0 : index
    %64 = vector.load %arg9[%c0_45, %c2_46, %c0_47, %c0_48] : memref<1x4x8x8xf32, #tpu.memory_space<vmem>>, vector<1x1x8x8xf32>
    %65 = vector.shape_cast %64 : vector<1x1x8x8xf32> to vector<8x8xf32>
    %66 = vector.shape_cast %63 : vector<8x8xf32> to vector<1x1x8x8xf32>
    tpu.vector_store %arg9[%c0_45, %c2_46, %c0_47, %c0_48], %66 {strides = array<i32>} : memref<1x4x8x8xf32, #tpu.memory_space<vmem>>, vector<1x1x8x8xf32>,
    %67 = vector.extract_strided_slice %30 {offsets = [0, 24], sizes = [8, 8], strides = [1, 1]} : vector<8x96xf32> to vector<8x8xf32>
    %c0_49 = arith.constant 0 : index
    %c3 = arith.constant 3 : index
    %c0_50 = arith.constant 0 : index
    %c0_51 = arith.constant 0 : index
    %68 = vector.load %arg7[%c0_49, %c3, %c0_50, %c0_51] : memref<1x4x8x8xf32, #tpu.memory_space<vmem>>, vector<1x1x8x8xf32>
    %69 = vector.shape_cast %68 : vector<1x1x8x8xf32> to vector<8x8xf32>
    %70 = vector.shape_cast %67 : vector<8x8xf32> to vector<1x1x8x8xf32>
    tpu.vector_store %arg7[%c0_49, %c3, %c0_50, %c0_51], %70 {strides = array<i32>} : memref<1x4x8x8xf32, #tpu.memory_space<vmem>>, vector<1x1x8x8xf32>,
    %71 = vector.extract_strided_slice %30 {offsets = [0, 56], sizes = [8, 8], strides = [1, 1]} : vector<8x96xf32> to vector<8x8xf32>
    %c0_52 = arith.constant 0 : index
    %c3_53 = arith.constant 3 : index
    %c0_54 = arith.constant 0 : index
    %c0_55 = arith.constant 0 : index
    %72 = vector.load %arg8[%c0_52, %c3_53, %c0_54, %c0_55] : memref<1x4x8x8xf32, #tpu.memory_space<vmem>>, vector<1x1x8x8xf32>
    %73 = vector.shape_cast %72 : vector<1x1x8x8xf32> to vector<8x8xf32>
    %74 = vector.shape_cast %71 : vector<8x8xf32> to vector<1x1x8x8xf32>
    tpu.vector_store %arg8[%c0_52, %c3_53, %c0_54, %c0_55], %74 {strides = array<i32>} : memref<1x4x8x8xf32, #tpu.memory_space<vmem>>, vector<1x1x8x8xf32>,
    %75 = vector.extract_strided_slice %30 {offsets = [0, 88], sizes = [8, 8], strides = [1, 1]} : vector<8x96xf32> to vector<8x8xf32>
    %c0_56 = arith.constant 0 : index
    %c3_57 = arith.constant 3 : index
    %c0_58 = arith.constant 0 : index
    %c0_59 = arith.constant 0 : index
    %76 = vector.load %arg9[%c0_56, %c3_57, %c0_58, %c0_59] : memref<1x4x8x8xf32, #tpu.memory_space<vmem>>, vector<1x1x8x8xf32>
    %77 = vector.shape_cast %76 : vector<1x1x8x8xf32> to vector<8x8xf32>
    %78 = vector.shape_cast %75 : vector<8x8xf32> to vector<1x1x8x8xf32>
    tpu.vector_store %arg9[%c0_56, %c3_57, %c0_58, %c0_59], %78 {strides = array<i32>} : memref<1x4x8x8xf32, #tpu.memory_space<vmem>>, vector<1x1x8x8xf32>,
    return
  }
  func.func @transform_0(%arg0: i32, %arg1: i32) -> (i32, i32, i32) {
    %c0_i32 = arith.constant 0 : i32
    %c0_i32_0 = arith.constant 0 : i32
    return %arg0, %arg1, %c0_i32 : i32, i32, i32
  }
  func.func @transform_1(%arg0: i32, %arg1: i32) -> (i32, i32) {
    %c0_i32 = arith.constant 0 : i32
    %c0_i32_0 = arith.constant 0 : i32
    %c0_i32_1 = arith.constant 0 : i32
    return %c0_i32, %c0_i32_0 : i32, i32
  }
  func.func @transform_2(%arg0: i32, %arg1: i32) -> (i32, i32) {
    %c0_i32 = arith.constant 0 : i32
    %c0_i32_0 = arith.constant 0 : i32
    %c0_i32_1 = arith.constant 0 : i32
    return %c0_i32, %c0_i32_0 : i32, i32
  }
  func.func @transform_3(%arg0: i32, %arg1: i32) -> (i32, i32) {
    %c0_i32 = arith.constant 0 : i32
    %c0_i32_0 = arith.constant 0 : i32
    %c0_i32_1 = arith.constant 0 : i32
    return %c0_i32, %c0_i32_0 : i32, i32
  }
  func.func @transform_4(%arg0: i32, %arg1: i32) -> (i32, i32) {
    %c0_i32 = arith.constant 0 : i32
    %c0_i32_0 = arith.constant 0 : i32
    %c0_i32_1 = arith.constant 0 : i32
    return %c0_i32, %c0_i32_0 : i32, i32
  }
  func.func @transform_5(%arg0: i32, %arg1: i32) -> (i32, i32, i32, i32) {
    %c0_i32 = arith.constant 0 : i32
    %c0_i32_0 = arith.constant 0 : i32
    %c0_i32_1 = arith.constant 0 : i32
    return %arg0, %c0_i32, %arg1, %c0_i32_0 : i32, i32, i32, i32
  }
  func.func @transform_6(%arg0: i32, %arg1: i32) -> (i32, i32, i32, i32) {
    %c0_i32 = arith.constant 0 : i32
    %c0_i32_0 = arith.constant 0 : i32
    %c0_i32_1 = arith.constant 0 : i32
    return %arg0, %c0_i32, %arg1, %c0_i32_0 : i32, i32, i32, i32
  }
  func.func @transform_7(%arg0: i32, %arg1: i32) -> (i32, i32, i32, i32) {
    %c0_i32 = arith.constant 0 : i32
    %c0_i32_0 = arith.constant 0 : i32
    %c0_i32_1 = arith.constant 0 : i32
    return %arg0, %c0_i32, %arg1, %c0_i32_0 : i32, i32, i32, i32
  }
}

module attributes {stable_mosaic.version = 11 : i64} {
  func.func @ln_qkv_kernel(%arg0: i32, %arg1: i32, %arg2: memref<1x8x32xf32, #tpu.memory_space<vmem>>, %arg3: memref<1x32xf32, #tpu.memory_space<vmem>>, %arg4: memref<1x32xf32, #tpu.memory_space<vmem>>, %arg5: memref<32x96xf32, #tpu.memory_space<vmem>>, %arg6: memref<1x96xf32, #tpu.memory_space<vmem>>, %arg7: memref<1x4x8x8xf32, #tpu.memory_space<vmem>>, %arg8: memref<1x4x8x8xf32, #tpu.memory_space<vmem>>, %arg9: memref<1x4x8x8xf32, #tpu.memory_space<vmem>>) attributes {dimension_semantics = [#tpu.dimension_semantics<parallel>, #tpu.dimension_semantics<parallel>], iteration_bounds = array<i64: 2, 2>, scalar_prefetch = 0 : i64, scratch_operands = 0 : i64, tpu.core_type = #tpu.core_type<tc>, window_params = [{transform_indices = @transform_0, window_bounds = array<i64: 1, 8, 32>}, {pipeline_mode = #tpu.pipeline_mode<synchronous>, transform_indices = @transform_1, window_bounds = array<i64: 1, 32>}, {pipeline_mode = #tpu.pipeline_mode<synchronous>, transform_indices = @transform_2, window_bounds = array<i64: 1, 32>}, {pipeline_mode = #tpu.pipeline_mode<synchronous>, transform_indices = @transform_3, window_bounds = array<i64: 32, 96>}, {pipeline_mode = #tpu.pipeline_mode<synchronous>, transform_indices = @transform_4, window_bounds = array<i64: 1, 96>}, {transform_indices = @transform_5, window_bounds = array<i64: 1, 4, 8, 8>}, {transform_indices = @transform_6, window_bounds = array<i64: 1, 4, 8, 8>}, {transform_indices = @transform_7, window_bounds = array<i64: 1, 4, 8, 8>}]} {
    %c0 = arith.constant 0 : index
    %c0_0 = arith.constant 0 : index
    %c0_1 = arith.constant 0 : index
    %0 = vector.load %arg2[%c0, %c0_0, %c0_1] : memref<1x8x32xf32, #tpu.memory_space<vmem>>, vector<1x8x32xf32>
    %1 = vector.shape_cast %0 : vector<1x8x32xf32> to vector<8x32xf32>
    %c0_2 = arith.constant 0 : index
    %c0_3 = arith.constant 0 : index
    %2 = vector.load %arg3[%c0_2, %c0_3] : memref<1x32xf32, #tpu.memory_space<vmem>>, vector<1x32xf32>
    %c0_4 = arith.constant 0 : index
    %c0_5 = arith.constant 0 : index
    %3 = vector.load %arg4[%c0_4, %c0_5] : memref<1x32xf32, #tpu.memory_space<vmem>>, vector<1x32xf32>
    %cst = arith.constant dense<0.000000e+00> : vector<8xf32>
    %4 = vector.multi_reduction <add>, %1, %cst [1] : vector<8x32xf32> to vector<8xf32>
    %5 = vector.shape_cast %4 : vector<8xf32> to vector<8x1xf32>
    %cst_6 = arith.constant 3.200000e+01 : f32
    %6 = vector.broadcast %cst_6 : f32 to vector<8x1xf32>
    %7 = arith.divf %5, %6 : vector<8x1xf32>
    %8 = vector.broadcast %7 : vector<8x1xf32> to vector<8x32xf32>
    %9 = arith.subf %1, %8 : vector<8x32xf32>
    %10 = arith.mulf %9, %9 : vector<8x32xf32>
    %cst_7 = arith.constant dense<0.000000e+00> : vector<8xf32>
    %11 = vector.multi_reduction <add>, %10, %cst_7 [1] : vector<8x32xf32> to vector<8xf32>
    %12 = vector.shape_cast %11 : vector<8xf32> to vector<8x1xf32>
    %cst_8 = arith.constant 3.200000e+01 : f32
    %13 = vector.broadcast %cst_8 : f32 to vector<8x1xf32>
    %14 = arith.divf %12, %13 : vector<8x1xf32>
    %15 = vector.broadcast %7 : vector<8x1xf32> to vector<8x32xf32>
    %16 = arith.subf %1, %15 : vector<8x32xf32>
    %cst_9 = arith.constant 9.99999974E-6 : f32
    %17 = vector.broadcast %cst_9 : f32 to vector<8x1xf32>
    %18 = arith.addf %14, %17 : vector<8x1xf32>
    %19 = math.rsqrt %18 : vector<8x1xf32>
    %20 = vector.broadcast %19 : vector<8x1xf32> to vector<8x32xf32>
    %21 = arith.mulf %16, %20 : vector<8x32xf32>
    %22 = vector.broadcast %2 : vector<1x32xf32> to vector<8x32xf32>
    %23 = arith.mulf %21, %22 : vector<8x32xf32>
    %24 = vector.broadcast %3 : vector<1x32xf32> to vector<8x32xf32>
    %25 = arith.addf %23, %24 : vector<8x32xf32>
    %c0_10 = arith.constant 0 : index
    %c0_11 = arith.constant 0 : index
    %26 = vector.load %arg5[%c0_10, %c0_11] : memref<32x96xf32, #tpu.memory_space<vmem>>, vector<32x96xf32>
    %cst_12 = arith.constant dense<0.000000e+00> : vector<8x96xf32>
    %27 = tpu.matmul %25, %26, %cst_12 {dimension_numbers = #tpu.dot_dimension_numbers<[1], [0], [0], [1], [0, 0, 1, 1], [], []>} : vector<8x32xf32>, vector<32x96xf32>, vector<8x96xf32> -> vector<8x96xf32>
    %c0_13 = arith.constant 0 : index
    %c0_14 = arith.constant 0 : index
    %28 = vector.load %arg6[%c0_13, %c0_14] : memref<1x96xf32, #tpu.memory_space<vmem>>, vector<1x96xf32>
    %29 = vector.broadcast %28 : vector<1x96xf32> to vector<8x96xf32>
    %30 = arith.addf %27, %29 : vector<8x96xf32>
    %31 = vector.extract_strided_slice %30 {offsets = [0, 0], sizes = [8, 8], strides = [1, 1]} : vector<8x96xf32> to vector<8x8xf32>
    %c0_15 = arith.constant 0 : index
    %c0_16 = arith.constant 0 : index
    %c0_17 = arith.constant 0 : index
    %c0_18 = arith.constant 0 : index
    %32 = vector.load %arg7[%c0_15, %c0_16, %c0_17, %c0_18] : memref<1x4x8x8xf32, #tpu.memory_space<vmem>>, vector<1x1x8x8xf32>
    %33 = vector.shape_cast %32 : vector<1x1x8x8xf32> to vector<8x8xf32>
    %34 = vector.shape_cast %31 : vector<8x8xf32> to vector<1x1x8x8xf32>
    tpu.vector_store %arg7[%c0_15, %c0_16, %c0_17, %c0_18], %34 {strides = array<i32>} : memref<1x4x8x8xf32, #tpu.memory_space<vmem>>, vector<1x1x8x8xf32>,
    %35 = vector.extract_strided_slice %30 {offsets = [0, 32], sizes = [8, 8], strides = [1, 1]} : vector<8x96xf32> to vector<8x8xf32>
    %c0_19 = arith.constant 0 : index
    %c0_20 = arith.constant 0 : index
    %c0_21 = arith.constant 0 : index
    %c0_22 = arith.constant 0 : index
    %36 = vector.load %arg8[%c0_19, %c0_20, %c0_21, %c0_22] : memref<1x4x8x8xf32, #tpu.memory_space<vmem>>, vector<1x1x8x8xf32>
    %37 = vector.shape_cast %36 : vector<1x1x8x8xf32> to vector<8x8xf32>
    %38 = vector.shape_cast %35 : vector<8x8xf32> to vector<1x1x8x8xf32>
    tpu.vector_store %arg8[%c0_19, %c0_20, %c0_21, %c0_22], %38 {strides = array<i32>} : memref<1x4x8x8xf32, #tpu.memory_space<vmem>>, vector<1x1x8x8xf32>,
    %39 = vector.extract_strided_slice %30 {offsets = [0, 64], sizes = [8, 8], strides = [1, 1]} : vector<8x96xf32> to vector<8x8xf32>
    %c0_23 = arith.constant 0 : index
    %c0_24 = arith.constant 0 : index
    %c0_25 = arith.constant 0 : index
    %c0_26 = arith.constant 0 : index
    %40 = vector.load %arg9[%c0_23, %c0_24, %c0_25, %c0_26] : memref<1x4x8x8xf32, #tpu.memory_space<vmem>>, vector<1x1x8x8xf32>
    %41 = vector.shape_cast %40 : vector<1x1x8x8xf32> to vector<8x8xf32>
    %42 = vector.shape_cast %39 : vector<8x8xf32> to vector<1x1x8x8xf32>
    tpu.vector_store %arg9[%c0_23, %c0_24, %c0_25, %c0_26], %42 {strides = array<i32>} : memref<1x4x8x8xf32, #tpu.memory_space<vmem>>, vector<1x1x8x8xf32>,
    %43 = vector.extract_strided_slice %30 {offsets = [0, 8], sizes = [8, 8], strides = [1, 1]} : vector<8x96xf32> to vector<8x8xf32>
    %c0_27 = arith.constant 0 : index
    %c1 = arith.constant 1 : index
    %c0_28 = arith.constant 0 : index
    %c0_29 = arith.constant 0 : index
    %44 = vector.load %arg7[%c0_27, %c1, %c0_28, %c0_29] : memref<1x4x8x8xf32, #tpu.memory_space<vmem>>, vector<1x1x8x8xf32>
    %45 = vector.shape_cast %44 : vector<1x1x8x8xf32> to vector<8x8xf32>
    %46 = vector.shape_cast %43 : vector<8x8xf32> to vector<1x1x8x8xf32>
    tpu.vector_store %arg7[%c0_27, %c1, %c0_28, %c0_29], %46 {strides = array<i32>} : memref<1x4x8x8xf32, #tpu.memory_space<vmem>>, vector<1x1x8x8xf32>,
    %47 = vector.extract_strided_slice %30 {offsets = [0, 40], sizes = [8, 8], strides = [1, 1]} : vector<8x96xf32> to vector<8x8xf32>
    %c0_30 = arith.constant 0 : index
    %c1_31 = arith.constant 1 : index
    %c0_32 = arith.constant 0 : index
    %c0_33 = arith.constant 0 : index
    %48 = vector.load %arg8[%c0_30, %c1_31, %c0_32, %c0_33] : memref<1x4x8x8xf32, #tpu.memory_space<vmem>>, vector<1x1x8x8xf32>
    %49 = vector.shape_cast %48 : vector<1x1x8x8xf32> to vector<8x8xf32>
    %50 = vector.shape_cast %47 : vector<8x8xf32> to vector<1x1x8x8xf32>
    tpu.vector_store %arg8[%c0_30, %c1_31, %c0_32, %c0_33], %50 {strides = array<i32>} : memref<1x4x8x8xf32, #tpu.memory_space<vmem>>, vector<1x1x8x8xf32>,
    %51 = vector.extract_strided_slice %30 {offsets = [0, 72], sizes = [8, 8], strides = [1, 1]} : vector<8x96xf32> to vector<8x8xf32>
    %c0_34 = arith.constant 0 : index
    %c1_35 = arith.constant 1 : index
    %c0_36 = arith.constant 0 : index
    %c0_37 = arith.constant 0 : index
    %52 = vector.load %arg9[%c0_34, %c1_35, %c0_36, %c0_37] : memref<1x4x8x8xf32, #tpu.memory_space<vmem>>, vector<1x1x8x8xf32>
    %53 = vector.shape_cast %52 : vector<1x1x8x8xf32> to vector<8x8xf32>
    %54 = vector.shape_cast %51 : vector<8x8xf32> to vector<1x1x8x8xf32>
    tpu.vector_store %arg9[%c0_34, %c1_35, %c0_36, %c0_37], %54 {strides = array<i32>} : memref<1x4x8x8xf32, #tpu.memory_space<vmem>>, vector<1x1x8x8xf32>,
    %55 = vector.extract_strided_slice %30 {offsets = [0, 16], sizes = [8, 8], strides = [1, 1]} : vector<8x96xf32> to vector<8x8xf32>
    %c0_38 = arith.constant 0 : index
    %c2 = arith.constant 2 : index
    %c0_39 = arith.constant 0 : index
    %c0_40 = arith.constant 0 : index
    %56 = vector.load %arg7[%c0_38, %c2, %c0_39, %c0_40] : memref<1x4x8x8xf32, #tpu.memory_space<vmem>>, vector<1x1x8x8xf32>
    %57 = vector.shape_cast %56 : vector<1x1x8x8xf32> to vector<8x8xf32>
    %58 = vector.shape_cast %55 : vector<8x8xf32> to vector<1x1x8x8xf32>
    tpu.vector_store %arg7[%c0_38, %c2, %c0_39, %c0_40], %58 {strides = array<i32>} : memref<1x4x8x8xf32, #tpu.memory_space<vmem>>, vector<1x1x8x8xf32>,
    %59 = vector.extract_strided_slice %30 {offsets = [0, 48], sizes = [8, 8], strides = [1, 1]} : vector<8x96xf32> to vector<8x8xf32>
    %c0_41 = arith.constant 0 : index
    %c2_42 = arith.constant 2 : index
    %c0_43 = arith.constant 0 : index
    %c0_44 = arith.constant 0 : index
    %60 = vector.load %arg8[%c0_41, %c2_42, %c0_43, %c0_44] : memref<1x4x8x8xf32, #tpu.memory_space<vmem>>, vector<1x1x8x8xf32>
    %61 = vector.shape_cast %60 : vector<1x1x8x8xf32> to vector<8x8xf32>
    %62 = vector.shape_cast %59 : vector<8x8xf32> to vector<1x1x8x8xf32>
    tpu.vector_store %arg8[%c0_41, %c2_42, %c0_43, %c0_44], %62 {strides = array<i32>} : memref<1x4x8x8xf32, #tpu.memory_space<vmem>>, vector<1x1x8x8xf32>,
    %63 = vector.extract_strided_slice %30 {offsets = [0, 80], sizes = [8, 8], strides = [1, 1]} : vector<8x96xf32> to vector<8x8xf32>
    %c0_45 = arith.constant 0 : index
    %c2_46 = arith.constant 2 : index
    %c0_47 = arith.constant 0 : index
    %c0_48 = arith.constant 0 : index
    %64 = vector.load %arg9[%c0_45, %c2_46, %c0_47, %c0_48] : memref<1x4x8x8xf32, #tpu.memory_space<vmem>>, vector<1x1x8x8xf32>
    %65 = vector.shape_cast %64 : vector<1x1x8x8xf32> to vector<8x8xf32>
    %66 = vector.shape_cast %63 : vector<8x8xf32> to vector<1x1x8x8xf32>
    tpu.vector_store %arg9[%c0_45, %c2_46, %c0_47, %c0_48], %66 {strides = array<i32>} : memref<1x4x8x8xf32, #tpu.memory_space<vmem>>, vector<1x1x8x8xf32>,
    %67 = vector.extract_strided_slice %30 {offsets = [0, 24], sizes = [8, 8], strides = [1, 1]} : vector<8x96xf32> to vector<8x8xf32>
    %c0_49 = arith.constant 0 : index
    %c3 = arith.constant 3 : index
    %c0_50 = arith.constant 0 : index
    %c0_51 = arith.constant 0 : index
    %68 = vector.load %arg7[%c0_49, %c3, %c0_50, %c0_51] : memref<1x4x8x8xf32, #tpu.memory_space<vmem>>, vector<1x1x8x8xf32>
    %69 = vector.shape_cast %68 : vector<1x1x8x8xf32> to vector<8x8xf32>
    %70 = vector.shape_cast %67 : vector<8x8xf32> to vector<1x1x8x8xf32>
    tpu.vector_store %arg7[%c0_49, %c3, %c0_50, %c0_51], %70 {strides = array<i32>} : memref<1x4x8x8xf32, #tpu.memory_space<vmem>>, vector<1x1x8x8xf32>,
    %71 = vector.extract_strided_slice %30 {offsets = [0, 56], sizes = [8, 8], strides = [1, 1]} : vector<8x96xf32> to vector<8x8xf32>
    %c0_52 = arith.constant 0 : index
    %c3_53 = arith.constant 3 : index
    %c0_54 = arith.constant 0 : index
    %c0_55 = arith.constant 0 : index
    %72 = vector.load %arg8[%c0_52, %c3_53, %c0_54, %c0_55] : memref<1x4x8x8xf32, #tpu.memory_space<vmem>>, vector<1x1x8x8xf32>
    %73 = vector.shape_cast %72 : vector<1x1x8x8xf32> to vector<8x8xf32>
    %74 = vector.shape_cast %71 : vector<8x8xf32> to vector<1x1x8x8xf32>
    tpu.vector_store %arg8[%c0_52, %c3_53, %c0_54, %c0_55], %74 {strides = array<i32>} : memref<1x4x8x8xf32, #tpu.memory_space<vmem>>, vector<1x1x8x8xf32>,
    %75 = vector.extract_strided_slice %30 {offsets = [0, 88], sizes = [8, 8], strides = [1, 1]} : vector<8x96xf32> to vector<8x8xf32>
    %c0_56 = arith.constant 0 : index
    %c3_57 = arith.constant 3 : index
    %c0_58 = arith.constant 0 : index
    %c0_59 = arith.constant 0 : index
    %76 = vector.load %arg9[%c0_56, %c3_57, %c0_58, %c0_59] : memref<1x4x8x8xf32, #tpu.memory_space<vmem>>, vector<1x1x8x8xf32>
    %77 = vector.shape_cast %76 : vector<1x1x8x8xf32> to vector<8x8xf32>
    %78 = vector.shape_cast %75 : vector<8x8xf32> to vector<1x1x8x8xf32>
    tpu.vector_store %arg9[%c0_56, %c3_57, %c0_58, %c0_59], %78 {strides = array<i32>} : memref<1x4x8x8xf32, #tpu.memory_space<vmem>>, vector<1x1x8x8xf32>,
    return
  }
  func.func @transform_0(%arg0: i32, %arg1: i32) -> (i32, i32, i32) {
    %c0_i32 = arith.constant 0 : i32
    %c0_i32_0 = arith.constant 0 : i32
    return %arg0, %arg1, %c0_i32 : i32, i32, i32
  }
  func.func @transform_1(%arg0: i32, %arg1: i32) -> (i32, i32) {
    %c0_i32 = arith.constant 0 : i32
    %c0_i32_0 = arith.constant 0 : i32
    %c0_i32_1 = arith.constant 0 : i32
    return %c0_i32, %c0_i32_0 : i32, i32
  }
  func.func @transform_2(%arg0: i32, %arg1: i32) -> (i32, i32) {
    %c0_i32 = arith.constant 0 : i32
    %c0_i32_0 = arith.constant 0 : i32
    %c0_i32_1 = arith.constant 0 : i32
    return %c0_i32, %c0_i32_0 : i32, i32
  }
  func.func @transform_3(%arg0: i32, %arg1: i32) -> (i32, i32) {
    %c0_i32 = arith.constant 0 : i32
    %c0_i32_0 = arith.constant 0 : i32
    %c0_i32_1 = arith.constant 0 : i32
    return %c0_i32, %c0_i32_0 : i32, i32
  }
  func.func @transform_4(%arg0: i32, %arg1: i32) -> (i32, i32) {
    %c0_i32 = arith.constant 0 : i32
    %c0_i32_0 = arith.constant 0 : i32
    %c0_i32_1 = arith.constant 0 : i32
    return %c0_i32, %c0_i32_0 : i32, i32
  }
  func.func @transform_5(%arg0: i32, %arg1: i32) -> (i32, i32, i32, i32) {
    %c0_i32 = arith.constant 0 : i32
    %c0_i32_0 = arith.constant 0 : i32
    %c0_i32_1 = arith.constant 0 : i32
    return %arg0, %c0_i32, %arg1, %c0_i32_0 : i32, i32, i32, i32
  }
  func.func @transform_6(%arg0: i32, %arg1: i32) -> (i32, i32, i32, i32) {
    %c0_i32 = arith.constant 0 : i32
    %c0_i32_0 = arith.constant 0 : i32
    %c0_i32_1 = arith.constant 0 : i32
    return %arg0, %c0_i32, %arg1, %c0_i32_0 : i32, i32, i32, i32
  }
  func.func @transform_7(%arg0: i32, %arg1: i32) -> (i32, i32, i32, i32) {
    %c0_i32 = arith.constant 0 : i32
    %c0_i32_0 = arith.constant 0 : i32
    %c0_i32_1 = arith.constant 0 : i32
    return %arg0, %c0_i32, %arg1, %c0_i32_0 : i32, i32, i32, i32
  }
}

</mosaic_0001>

<llo_original>
// kernel: tpu_custom_call.1
$region0: #{tpu_custom_call.1}
  #allocation0 [shape = 'u32[]', space=smem, size = 0x4, offset = 0x4, fixed_abs, tag = 'smem constant byte address 0x4 - core index']
  #allocation1 [shape = 'u32[72,128]{1,0:T(1,128)}', space=vmem, size = 0x9000, scoped, tag = 'internal scratch']
  %s0 = inlined_call_operand.hbm [shape: f32[2,16,32], index: 0, kind: input, shape index: {}]
  %s1 = inlined_call_operand.hbm [shape: f32[1,32], index: 1, kind: input, shape index: {}]
  %s2 = inlined_call_operand.vmem [shape: f32[1,32], index: 2, kind: input, shape index: {}]
  %s3 = inlined_call_operand.hbm [shape: f32[32,96], index: 3, kind: input, shape index: {}]
  %s4 = inlined_call_operand.vmem [shape: f32[1,96], index: 4, kind: input, shape index: {}]
  %s5 = inlined_call_operand.vmem [shape: f32[2,4,16,8], index: 5, kind: output, shape index: {0}]
  %s6 = inlined_call_operand.vmem [shape: f32[2,4,16,8], index: 6, kind: output, shape index: {1}]
  %s7 = inlined_call_operand.vmem [shape: f32[2,4,16,8], index: 7, kind: output, shape index: {2}]
  %8 = xla_tuple %s5, %s6, %s7
  %s9 = sld [smem:[#allocation0]]
  $region183: #{tpu_custom_call.1} parent=0
    _
  %s11 = ssub.s32 1, %s9
  %s12 = scalar_select 0, %s11, %s9
  $region1: #{tpu_custom_call.1} parent=0
    #allocation2 [shape = 'u8[8192]{0}', space=vmem, size = 0x2000, scoped, tag = 'input window, operand 0']
    #allocation3 [shape = 's32[2]{0}', space=sflag, size = 0x8, scoped, tag = 'scoped memory for tpu_custom_call.1']
    #allocation4 [shape = 'u8[512]{0}', space=vmem, size = 0x400, scoped, tag = 'input window, operand 1, single buffered']
    #allocation5 [shape = 's32[1]{0}', space=sflag, size = 0x4, scoped, tag = 'scoped memory for tpu_custom_call.1']
    #allocation6 [shape = 'u8[16384]{0}', space=vmem, size = 0x4000, scoped, tag = 'input window, operand 3, single buffered']
    #allocation7 [shape = 'u8[32768]{0}', space=vmem, size = 0x8000, scoped, tag = 'output window, operand 0']
    #allocation8 [shape = 'u8[32768]{0}', space=vmem, size = 0x8000, scoped, tag = 'output window, operand 1']
    #allocation9 [shape = 'u8[32768]{0}', space=vmem, size = 0x8000, scoped, tag = 'output window, operand 2']
    %13 = vsyncpa [#allocation3], 0
    %s14 = scalar_lea.sflag [#allocation3], 1
    %15 = vsyncpa %s14, 0
    %16 = vsyncpa [#allocation5], 0
    loop: start=0, step=1, limit=6
    $region2: #{tpu_custom_call.1} parent=1 // loop_pre_header
      _
    $region3: #{tpu_custom_call.1} parent=1 // loop_header
      %s18 = sphi 0, %s22
      %p19 = scmp.ge.s32.totalorder %s18, 6
      %s25 = sphi 0, %s37
      %s26 = sphi 0, %s33
      %s27 = sphi 0, %s25
      %s28 = sphi 0, %s26
      %s29 = sphi 0, %s27
      %s30 = sphi 0, %s28
      %s42 = sphi 0, %s44
      %s45 = sphi 0, %s42
      %s46 = sphi 0, %s45
      %s62 = sphi 0, %s46
      %s66 = sphi 0, %s66
      %s68 = sphi 0, %s66
      %s69 = sphi 0, %s68
      %s83 = sphi 0, %s69
      %s87 = sphi 0, %s87
      %s89 = sphi 0, %s87
      %s90 = sphi 0, %s89
      %s104 = sphi 0, %s90
      %s108 = sphi 0, %s108
      %s110 = sphi 0, %s108
      %s111 = sphi 0, %s110
      %s125 = sphi 0, %s111
      %s129 = sphi 0, %s129
      %s131 = sphi 0, %s129
      %s132 = sphi 0, %s131
      %s146 = sphi 0, %s132
      %s154 = sphi 0, %s156
      %s157 = sphi 0, %s154
      %s158 = sphi 0, %s157
      %s174 = sphi 0, %s158
      %s182 = sphi 0, %s184
      %s185 = sphi 0, %s182
      %s186 = sphi 0, %s185
      %s202 = sphi 0, %s186
      %s210 = sphi 0, %s212
      %s213 = sphi 0, %s210
      %s214 = sphi 0, %s213
      %s230 = sphi 0, %s214
    $region4: #{tpu_custom_call.1} parent=1 // loop_header_branch
      %21 = sbr.rel (%p19) target = $region8
    $region5: #{tpu_custom_call.1} parent=1 // loop_body
      %s23 = ssub.s32 %s18, 1
      %s24 = ssub.s32 %s18, 2
      %s31 = sadd.s32 1, %s26
      %p32 = scmp.ge.s32.totalorder %s31, 2
      %s33 = scalar_select %p32, 0, %s31
      %s34 = sadd.s32 1, %s25
      %s35 = scalar_select %p32, %s34, %s25
      %p36 = scmp.ge.s32.totalorder %s35, 2
      %s37 = scalar_select %p36, 0, %s35
      %s38 = ssub.s32 %s25, %s37
      %s39 = ssub.s32 %s26, %s33
      %s40 = sor.u32 %s38, %s39
      %p41 = scmp.eq.s32.totalorder %s40, 0
      %s43 = sadd.s32 %s42, 1
      %s44 = scalar_select %p41, %s42, %s43
      %p47 = pneg %p41
      %p48 = scmp.eq.s32.totalorder %s18, 3
      %p49 = por %p47, %p48
      %p50 = scmp.ne.s32.totalorder %s42, %s45
      %p51 = scmp.eq.s32.totalorder %s18, 0
      %p52 = por %p50, %p51
      %p53 = scmp.ne.s32.totalorder %s42, %s45
      %p54 = scmp.eq.s32.totalorder %s23, 3
      %p55 = por %p53, %p54
      %p56 = scmp.ne.s32.totalorder %s45, %s46
      %p57 = scmp.eq.s32.totalorder %s23, 0
      %p58 = por %p56, %p57
      %p59 = scmp.ne.s32.totalorder %s45, %s46
      %p60 = scmp.eq.s32.totalorder %s24, 3
      %p61 = por %p59, %p60
      %p63 = scmp.ne.s32.totalorder %s46, %s62
      %p64 = scmp.eq.s32.totalorder %s24, 0
      %p65 = por %p63, %p64
      %s67 = sadd.s32 %s66, 1
      %p70 = scmp.eq.s32.totalorder %s18, 3
      %p71 = scmp.ne.s32.totalorder %s66, %s68
      %p72 = scmp.eq.s32.totalorder %s18, 0
      %p73 = por %p71, %p72
      %p74 = scmp.ne.s32.totalorder %s66, %s68
      %p75 = scmp.eq.s32.totalorder %s23, 3
      %p76 = por %p74, %p75
      %p77 = scmp.ne.s32.totalorder %s68, %s69
      %p78 = scmp.eq.s32.totalorder %s23, 0
      %p79 = por %p77, %p78
      %p80 = scmp.ne.s32.totalorder %s68, %s69
      %p81 = scmp.eq.s32.totalorder %s24, 3
      %p82 = por %p80, %p81
      %p84 = scmp.ne.s32.totalorder %s69, %s83
      %p85 = scmp.eq.s32.totalorder %s24, 0
      %p86 = por %p84, %p85
      %s88 = sadd.s32 %s87, 1
      %p91 = scmp.eq.s32.totalorder %s18, 3
      %p92 = scmp.ne.s32.totalorder %s87, %s89
      %p93 = scmp.eq.s32.totalorder %s18, 0
      %p94 = por %p92, %p93
      %p95 = scmp.ne.s32.totalorder %s87, %s89
      %p96 = scmp.eq.s32.totalorder %s23, 3
      %p97 = por %p95, %p96
      %p98 = scmp.ne.s32.totalorder %s89, %s90
      %p99 = scmp.eq.s32.totalorder %s23, 0
      %p100 = por %p98, %p99
      %p101 = scmp.ne.s32.totalorder %s89, %s90
      %p102 = scmp.eq.s32.totalorder %s24, 3
      %p103 = por %p101, %p102
      %p105 = scmp.ne.s32.totalorder %s90, %s104
      %p106 = scmp.eq.s32.totalorder %s24, 0
      %p107 = por %p105, %p106
      %s109 = sadd.s32 %s108, 1
      %p112 = scmp.eq.s32.totalorder %s18, 3
      %p113 = scmp.ne.s32.totalorder %s108, %s110
      %p114 = scmp.eq.s32.totalorder %s18, 0
      %p115 = por %p113, %p114
      %p116 = scmp.ne.s32.totalorder %s108, %s110
      %p117 = scmp.eq.s32.totalorder %s23, 3
      %p118 = por %p116, %p117
      %p119 = scmp.ne.s32.totalorder %s110, %s111
      %p120 = scmp.eq.s32.totalorder %s23, 0
      %p121 = por %p119, %p120
      %p122 = scmp.ne.s32.totalorder %s110, %s111
      %p123 = scmp.eq.s32.totalorder %s24, 3
      %p124 = por %p122, %p123
      %p126 = scmp.ne.s32.totalorder %s111, %s125
      %p127 = scmp.eq.s32.totalorder %s24, 0
      %p128 = por %p126, %p127
      %s130 = sadd.s32 %s129, 1
      %p133 = scmp.eq.s32.totalorder %s18, 3
      %p134 = scmp.ne.s32.totalorder %s129, %s131
      %p135 = scmp.eq.s32.totalorder %s18, 0
      %p136 = por %p134, %p135
      %p137 = scmp.ne.s32.totalorder %s129, %s131
      %p138 = scmp.eq.s32.totalorder %s23, 3
      %p139 = por %p137, %p138
      %p140 = scmp.ne.s32.totalorder %s131, %s132
      %p141 = scmp.eq.s32.totalorder %s23, 0
      %p142 = por %p140, %p141
      %p143 = scmp.ne.s32.totalorder %s131, %s132
      %p144 = scmp.eq.s32.totalorder %s24, 3
      %p145 = por %p143, %p144
      %p147 = scmp.ne.s32.totalorder %s132, %s146
      %p148 = scmp.eq.s32.totalorder %s24, 0
      %p149 = por %p147, %p148
      %s150 = ssub.s32 %s25, %s37
      %s151 = ssub.s32 %s26, %s33
      %s152 = sor.u32 %s150, %s151
      %p153 = scmp.eq.s32.totalorder %s152, 0
      %s155 = sadd.s32 %s154, 1
      %s156 = scalar_select %p153, %s154, %s155
      %p159 = pneg %p153
      %p160 = scmp.eq.s32.totalorder %s18, 3
      %p161 = por %p159, %p160
      %p162 = scmp.ne.s32.totalorder %s154, %s157
      %p163 = scmp.eq.s32.totalorder %s18, 0
      %p164 = por %p162, %p163
      %p165 = scmp.ne.s32.totalorder %s154, %s157
      %p166 = scmp.eq.s32.totalorder %s23, 3
      %p167 = por %p165, %p166
      %p168 = scmp.ne.s32.totalorder %s157, %s158
      %p169 = scmp.eq.s32.totalorder %s23, 0
      %p170 = por %p168, %p169
      %p171 = scmp.ne.s32.totalorder %s157, %s158
      %p172 = scmp.eq.s32.totalorder %s24, 3
      %p173 = por %p171, %p172
      %p175 = scmp.ne.s32.totalorder %s158, %s174
      %p176 = scmp.eq.s32.totalorder %s24, 0
      %p177 = por %p175, %p176
      %s178 = ssub.s32 %s25, %s37
      %s179 = ssub.s32 %s26, %s33
      %s180 = sor.u32 %s178, %s179
      %p181 = scmp.eq.s32.totalorder %s180, 0
      %s183 = sadd.s32 %s182, 1
      %s184 = scalar_select %p181, %s182, %s183
      %p187 = pneg %p181
      %p188 = scmp.eq.s32.totalorder %s18, 3
      %p189 = por %p187, %p188
      %p190 = scmp.ne.s32.totalorder %s182, %s185
      %p191 = scmp.eq.s32.totalorder %s18, 0
      %p192 = por %p190, %p191
      %p193 = scmp.ne.s32.totalorder %s182, %s185
      %p194 = scmp.eq.s32.totalorder %s23, 3
      %p195 = por %p193, %p194
      %p196 = scmp.ne.s32.totalorder %s185, %s186
      %p197 = scmp.eq.s32.totalorder %s23, 0
      %p198 = por %p196, %p197
      %p199 = scmp.ne.s32.totalorder %s185, %s186
      %p200 = scmp.eq.s32.totalorder %s24, 3
      %p201 = por %p199, %p200
      %p203 = scmp.ne.s32.totalorder %s186, %s202
      %p204 = scmp.eq.s32.totalorder %s24, 0
      %p205 = por %p203, %p204
      %s206 = ssub.s32 %s25, %s37
      %s207 = ssub.s32 %s26, %s33
      %s208 = sor.u32 %s206, %s207
      %p209 = scmp.eq.s32.totalorder %s208, 0
      %s211 = sadd.s32 %s210, 1
      %s212 = scalar_select %p209, %s210, %s211
      %p215 = pneg %p209
      %p216 = scmp.eq.s32.totalorder %s18, 3
      %p217 = por %p215, %p216
      %p218 = scmp.ne.s32.totalorder %s210, %s213
      %p219 = scmp.eq.s32.totalorder %s18, 0
      %p220 = por %p218, %p219
      %p221 = scmp.ne.s32.totalorder %s210, %s213
      %p222 = scmp.eq.s32.totalorder %s23, 3
      %p223 = por %p221, %p222
      %p224 = scmp.ne.s32.totalorder %s213, %s214
      %p225 = scmp.eq.s32.totalorder %s23, 0
      %p226 = por %p224, %p225
      %p227 = scmp.ne.s32.totalorder %s213, %s214
      %p228 = scmp.eq.s32.totalorder %s24, 3
      %p229 = por %p227, %p228
      %p231 = scmp.ne.s32.totalorder %s214, %s230
      %p232 = scmp.eq.s32.totalorder %s24, 0
      %p233 = por %p231, %p232
      %p234 = scmp.le.s32.totalorder 1, %s18
      %p235 = scmp.lt.s32.totalorder %s18, 5
      %p236 = pnand %p234, %p235
      %p237 = pneg %p236
      // Predicated region
      $region9: #{tpu_custom_call.1} parent=5 // pred_check
        _
      $region10: #{tpu_custom_call.1} parent=5 // pred_check_branch
        %239 = sbr.rel (%p236) target = $region12
      $region11: #{tpu_custom_call.1} parent=5 // pred_region
        %s240 = ssub.s32 %s18, 1
        // Predicated region
        $region13: #{tpu_custom_call.1} parent=11 // pred_check
          %p241 = pneg %p79
        $region14: #{tpu_custom_call.1} parent=11 // pred_check_branch
          %243 = sbr.rel (%p241) target = $region16
        $region15: #{tpu_custom_call.1} parent=11 // pred_region
          %245 = vsyncadd [#allocation5], 0
          %s247 = sshll.u32 %s1, 4
          %s248 = int_to_ptr.hbm [resolvable:$true] %s247
          %s249 = sshll.u32 [#allocation4], 4
          %s250 = int_to_ptr.vmem [resolvable:$true] %s249
          %252 = dma.hbm_to_vmem [thread:$0]  %s248, 16, %s250, [#allocation5]
        $region16: #{tpu_custom_call.1} parent=11 // pred_fallthru
          _
        // Predicated region
        $region17: #{tpu_custom_call.1} parent=11 // pred_check
          %p253 = pneg %p100
        $region18: #{tpu_custom_call.1} parent=11 // pred_check_branch
          %255 = sbr.rel (%p253) target = $region20
        $region19: #{tpu_custom_call.1} parent=11 // pred_region
          _
        $region20: #{tpu_custom_call.1} parent=11 // pred_fallthru
          _
        // Predicated region
        $region21: #{tpu_custom_call.1} parent=11 // pred_check
          %p256 = pneg %p121
        $region22: #{tpu_custom_call.1} parent=11 // pred_check_branch
          %258 = sbr.rel (%p256) target = $region24
        $region23: #{tpu_custom_call.1} parent=11 // pred_region
          %260 = vsyncadd [#allocation5], 0
          %s261 = sshll.u32 %s3, 4
          %s262 = int_to_ptr.hbm [resolvable:$true] %s261
          %s263 = sshll.u32 [#allocation6], 4
          %s264 = int_to_ptr.vmem [resolvable:$true] %s263
          %269 = dma.hbm_to_vmem [thread:$0]  %s262, 512, %s264, [#allocation5], 128, 128, 8
        $region24: #{tpu_custom_call.1} parent=11 // pred_fallthru
          _
        // Predicated region
        $region25: #{tpu_custom_call.1} parent=11 // pred_check
          %p270 = pneg %p142
        $region26: #{tpu_custom_call.1} parent=11 // pred_check_branch
          %272 = sbr.rel (%p270) target = $region28
        $region27: #{tpu_custom_call.1} parent=11 // pred_region
          _
        $region28: #{tpu_custom_call.1} parent=11 // pred_fallthru
          _
      $region12: #{tpu_custom_call.1} parent=5 // pred_fallthru
        _
      %p273 = scmp.lt.s32.totalorder %s18, 4
      // Predicated region
      $region29: #{tpu_custom_call.1} parent=5 // pred_check
        %p274 = pneg %p273
      $region30: #{tpu_custom_call.1} parent=5 // pred_check_branch
        %276 = sbr.rel (%p274) target = $region32
      $region31: #{tpu_custom_call.1} parent=5 // pred_region
        // Predicated region
        $region33: #{tpu_custom_call.1} parent=31 // pred_check
          %p277 = pneg %p52
        $region34: #{tpu_custom_call.1} parent=31 // pred_check_branch
          %279 = sbr.rel (%p277) target = $region36
        $region35: #{tpu_custom_call.1} parent=31 // pred_region
          %s280 = sand.u32 %s42, 1
          %s281 = scalar_lea.sflag [#allocation3], %s280
          %s282 = sand.u32 %s42, 1
          %s283 = smul.addr %s282, 8
          %s284 = scalar_lea.vmem [#allocation2], %s283
          %286 = vsyncadd %s281, 0
          %s287 = smul.addr %s25, 2
          %s288 = sadd.s32 %s26, %s287
          %s289 = smul.addr %s288, 8
          %s290 = scalar_lea.hbm %s0, %s289
          %s292 = sshll.u32 %s290, 4
          %s293 = int_to_ptr.hbm [resolvable:$true] %s292
          %s294 = sshll.u32 %s284, 4
          %s295 = int_to_ptr.vmem [resolvable:$true] %s294
          %297 = dma.hbm_to_vmem [thread:$0]  %s293, 128, %s295, %s281
        $region36: #{tpu_custom_call.1} parent=31 // pred_fallthru
          _
      $region32: #{tpu_custom_call.1} parent=5 // pred_fallthru
        _
      %p298 = scmp.le.s32.totalorder 1, %s18
      %p299 = scmp.lt.s32.totalorder %s18, 5
      %p300 = pnand %p298, %p299
      %p301 = pneg %p300
      // Predicated region
      $region37: #{tpu_custom_call.1} parent=5 // pred_check
        _
      $region38: #{tpu_custom_call.1} parent=5 // pred_check_branch
        %303 = sbr.rel (%p300) target = $region40
      $region39: #{tpu_custom_call.1} parent=5 // pred_region
        %s304 = ssub.s32 %s18, 1
        %s305 = sand.u32 %s45, 1
        %s306 = scalar_lea.sflag [#allocation3], %s305
        %s307 = sand.u32 %s45, 1
        %s308 = smul.addr %s307, 8
        %s309 = scalar_lea.vmem [#allocation2], %s308
        // Predicated region
        $region41: #{tpu_custom_call.1} parent=39 // pred_check
          %p310 = pneg %p58
        $region42: #{tpu_custom_call.1} parent=39 // pred_check_branch
          %312 = sbr.rel (%p310) target = $region44
        $region43: #{tpu_custom_call.1} parent=39 // pred_region
          %314 = dma.done %s306, 128
        $region44: #{tpu_custom_call.1} parent=39 // pred_fallthru
          _
        // Predicated region
        $region45: #{tpu_custom_call.1} parent=39 // pred_check
          %p315 = pneg %p79
        $region46: #{tpu_custom_call.1} parent=39 // pred_check_branch
          %317 = sbr.rel (%p315) target = $region48
        $region47: #{tpu_custom_call.1} parent=39 // pred_region
          %319 = dma.done [#allocation5], 16
        $region48: #{tpu_custom_call.1} parent=39 // pred_fallthru
          _
        // Predicated region
        $region49: #{tpu_custom_call.1} parent=39 // pred_check
          %p320 = pneg %p121
        $region50: #{tpu_custom_call.1} parent=39 // pred_check_branch
          %322 = sbr.rel (%p320) target = $region52
        $region51: #{tpu_custom_call.1} parent=39 // pred_region
          %324 = dma.done [#allocation5], 512
        $region52: #{tpu_custom_call.1} parent=39 // pred_fallthru
          _
        %s325 = sand.u32 %s45, 1
        %s326 = scalar_lea.sflag [#allocation3], %s325
        %s327 = sand.u32 %s45, 1
        %s328 = smul.addr %s327, 8
        %s329 = scalar_lea.vmem [#allocation2], %s328
        %p330 = pneg %p58
        %p331 = pneg %p55
        %p332 = pneg %p79
        %p333 = pneg %p76
        %p334 = pneg %p100
        %p335 = pneg %p97
        %p336 = pneg %p121
        %p337 = pneg %p118
        %p338 = pneg %p142
        %p339 = pneg %p139
        %p340 = pneg %p170
        %p341 = pneg %p167
        %s342 = sand.u32 %s157, 1
        %s343 = sand.u32 %s157, 1
        %s344 = smul.addr %s343, 32
        %s345 = scalar_lea.vmem [#allocation7], %s344
        %p346 = pneg %p198
        %p347 = pneg %p195
        %s348 = sand.u32 %s185, 1
        %s349 = sand.u32 %s185, 1
        %s350 = smul.addr %s349, 32
        %s351 = scalar_lea.vmem [#allocation8], %s350
        %p352 = pneg %p226
        %p353 = pneg %p223
        %s354 = sand.u32 %s213, 1
        %s355 = sand.u32 %s213, 1
        %s356 = smul.addr %s355, 32
        %s357 = scalar_lea.vmem [#allocation9], %s356
        %v358 = vld [vmem:[%s309] sm:$0xff]
        %v359 = vld [vmem:[#allocation4] sm:$0x1]
        %v360 = vld [vmem:[%s2] sm:$0x1]
        %vm361 = vcmask 261120
        %v362 = vsel %vm361, %v358, 0.0
        %363 = vadd.xlane.f32.xlu0 %v362
        %v364 = vpop.xlane.xlu0 %363
        %v365 = vrcp.pop 32.0
        %v366 = vmul.f32 32.0, %v365
        %v367 = vsub.f32 1.0, %v366
        %v368 = vmul.f32 %v365, %v367
        %v369 = vadd.f32 %v365, %v368
        %vm370 = vweird.f32 %v365
        %v371 = vsel %vm370, %v365, %v369
        %v372 = vmul.f32 %v364, %v371
        %v373 = vsub.f32 %v358, %v372
        %v374 = vmul.f32 %v373, %v373
        %v375 = vsel %vm361, %v374, 0.0
        %376 = vadd.xlane.f32.xlu0 %v375
        %v377 = vpop.xlane.xlu0 %376
        %v378 = vmul.f32 %v377, %v371
        %v379 = vadd.f32 %v378, 1e-05
        %v380 = vrsqrt.pop %v379
        %v381 = vmul.f32 %v380, %v379
        %v382 = vmul.f32 %v381, %v380
        %v383 = vmul.f32 0.5, %v382
        %v384 = vsub.f32 1.5, %v383
        %v385 = vmul.f32 %v380, %v384
        %vm386 = vweird.f32 %v379
        %vm387 = vweird.f32 %v380
        %vm388 = vmor %vm386, %vm387
        %v389 = vsel %vm388, %v380, %v385
        %v390 = vmul.f32 %v373, %v389
        %v392 = vperm.slane %v359, 0
        %v394 = vmul.f32 %v390, %v392
        %v396 = vperm.slane %v360, 0
        %v398 = vadd.f32 %v394, %v396
        %v399 = vld [vmem:[#allocation6] sm:$0xff]
        %v400 = vld [vmem:[#allocation6 + $0x8] sm:$0xff]
        %v401 = vld [vmem:[#allocation6 + $0x10] sm:$0xff]
        %v402 = vld [vmem:[#allocation6 + $0x18] sm:$0xff]
        %v403 = vld [vmem:[%s4] sm:$0x1]
        %v405 = vperm.slane %v403, 0
        %v408 = vsel %vm361, %v398, 0
        %410 = vmatpush.msra.mxu0 0.0
        %411 = vmatpush.msra.mxu0 0.0
        %412 = vmatpush.msra.mxu0 0.0
        %413 = vmatpush.msra.mxu0 0.0
        %414 = vmatpush.msra.mxu0 0.0
        %415 = vmatpush.msra.mxu0 0.0
        %416 = vmatpush.msra.mxu0 0.0
        %417 = vmatpush.msra.mxu0 0.0
        %418 = vmatpush.msra.mxu0 0.0
        %419 = vmatpush.msra.mxu0 0.0
        %420 = vmatpush.msra.mxu0 0.0
        %421 = vmatpush.msra.mxu0 0.0
        %422 = vmatpush.msra.mxu0 %v402
        %423 = vmatpush.msra.mxu0 %v401
        %424 = vmatpush.msra.mxu0 %v400
        %425 = vmatpush.msra.mxu0 %v399
        %426 = vmatmul.f32.gmra.mxu0 %v408
        %v427 = vpop.f32.mrf.mxu0
        %v428 = vadd.f32 %v405, %v427
        %429 = vdwg.mxu0
        %vm430 = vcmask 64512
        %431 = vst.msk [vmem:[%s345] sm:$0xff] %vm430, %v428
        %433 = vrot.lane.b32.xlu0 %v428, 96
        %v434 = vpop.permute.xlu0 %433
        %436 = vst.msk [vmem:[%s351] sm:$0xff] %vm430, %v434
        %437 = vrot.lane.b32.xlu0 %v428, 64
        %v438 = vpop.permute.xlu0 %437
        %440 = vst.msk [vmem:[%s357] sm:$0xff] %vm430, %v438
        %441 = vrot.lane.b32.xlu0 %v428, 120
        %v442 = vpop.permute.xlu0 %441
        %s444 = scalar_lea.vmem %s345, 8 [#allocation7]
        %445 = vst.msk [vmem:[%s444] sm:$0xff] %vm430, %v442
        %446 = vrot.lane.b32.xlu0 %v428, 88
        %v447 = vpop.permute.xlu0 %446
        %s449 = scalar_lea.vmem %s351, 8 [#allocation8]
        %450 = vst.msk [vmem:[%s449] sm:$0xff] %vm430, %v447
        %451 = vrot.lane.b32.xlu0 %v428, 56
        %v452 = vpop.permute.xlu0 %451
        %s454 = scalar_lea.vmem %s357, 8 [#allocation9]
        %455 = vst.msk [vmem:[%s454] sm:$0xff] %vm430, %v452
        %456 = vrot.lane.b32.xlu0 %v428, 112
        %v457 = vpop.permute.xlu0 %456
        %s459 = scalar_lea.vmem %s345, 16 [#allocation7]
        %460 = vst.msk [vmem:[%s459] sm:$0xff] %vm430, %v457
        %461 = vrot.lane.b32.xlu0 %v428, 80
        %v462 = vpop.permute.xlu0 %461
        %s464 = scalar_lea.vmem %s351, 16 [#allocation8]
        %465 = vst.msk [vmem:[%s464] sm:$0xff] %vm430, %v462
        %466 = vrot.lane.b32.xlu0 %v428, 48
        %v467 = vpop.permute.xlu0 %466
        %s469 = scalar_lea.vmem %s357, 16 [#allocation9]
        %470 = vst.msk [vmem:[%s469] sm:$0xff] %vm430, %v467
        %471 = vrot.lane.b32.xlu0 %v428, 104
        %v472 = vpop.permute.xlu0 %471
        %s474 = scalar_lea.vmem %s345, 24 [#allocation7]
        %475 = vst.msk [vmem:[%s474] sm:$0xff] %vm430, %v472
        %476 = vrot.lane.b32.xlu0 %v428, 72
        %v477 = vpop.permute.xlu0 %476
        %s479 = scalar_lea.vmem %s351, 24 [#allocation8]
        %480 = vst.msk [vmem:[%s479] sm:$0xff] %vm430, %v477
        %481 = vrot.lane.b32.xlu0 %v428, 40
        %v482 = vpop.permute.xlu0 %481
        %s484 = scalar_lea.vmem %s357, 24 [#allocation9]
        %485 = vst.msk [vmem:[%s484] sm:$0xff] %vm430, %v482
        %s486 = sand.u32 %s157, 1
        %s487 = sand.u32 %s157, 1
        %s488 = smul.addr %s487, 32
        %s489 = scalar_lea.vmem [#allocation7], %s488
        %s490 = sand.u32 %s185, 1
        %s491 = sand.u32 %s185, 1
        %s492 = smul.addr %s491, 32
        %s493 = scalar_lea.vmem [#allocation8], %s492
        %s494 = sand.u32 %s213, 1
        %s495 = sand.u32 %s213, 1
        %s496 = smul.addr %s495, 32
        %s497 = scalar_lea.vmem [#allocation9], %s496
        // Predicated region
        $region53: #{tpu_custom_call.1} parent=39 // pred_check
          %p498 = pneg %p167
        $region54: #{tpu_custom_call.1} parent=39 // pred_check_branch
          %500 = sbr.rel (%p498) target = $region56
        $region55: #{tpu_custom_call.1} parent=39 // pred_region
          %s501 = smul.addr %s27, 8
          %s502 = sadd.s32 %s28, %s501
          %s503 = smul.addr %s502, 8
          %s504 = scalar_lea.vmem %s5, %s503
          // Predicated region
          $region57: #{tpu_custom_call.1} parent=55 // pred_check
            _
          $region58: #{tpu_custom_call.1} parent=55 // pred_check_branch
            %506 = sbr.rel (0) target = $region60
          $region59: #{tpu_custom_call.1} parent=55 // pred_region
            // Predicated region
            $region61: #{tpu_custom_call.1} parent=59 // pred_check
              _
            $region62: #{tpu_custom_call.1} parent=59 // pred_check_branch
              %508 = sbr.rel (0) target = $region64
            $region63: #{tpu_custom_call.1} parent=59 // pred_region
              // Predicated region
              $region76: #{tpu_custom_call.1} parent=63 // pred_check
                _
              $region77: #{tpu_custom_call.1} parent=63 // pred_check_branch
                %530 = sbr.rel (0) target = $region79
              $region78: #{tpu_custom_call.1} parent=63 // pred_region
                loop: start=0, step=1, limit=1
                $region80: #{tpu_custom_call.1} parent=78 // loop_pre_header
                  _
                $region81: #{tpu_custom_call.1} parent=78 // loop_header
                  %s532 = sphi 0, %s536
                  %p533 = scmp.ge.s32.totalorder %s532, 1
                  %s537 = sphi %s489, %s489
                  %s538 = sphi %s504, %s504
                $region82: #{tpu_custom_call.1} parent=78 // loop_header_branch
                  %535 = sbr.rel (%p533) target = $region86
                $region83: #{tpu_custom_call.1} parent=78 // loop_body
                  %v539 = vld [vmem:[%s537] sm:$0xff]
                  %540 = vst [vmem:[%s538] sm:$0xff] %v539
                  %v541 = vld [vmem:[%s537 + $0x8] sm:$0xff]
                  %542 = vst [vmem:[%s538 + $0x10] sm:$0xff] %v541
                  %v543 = vld [vmem:[%s537 + $0x10] sm:$0xff]
                  %544 = vst [vmem:[%s538 + $0x20] sm:$0xff] %v543
                  %v545 = vld [vmem:[%s537 + $0x18] sm:$0xff]
                  %546 = vst [vmem:[%s538 + $0x30] sm:$0xff] %v545
                $region84: #{tpu_custom_call.1} parent=78 // loop_footer
                  %s536 = sadd.s32 1, %s532
                $region85: #{tpu_custom_call.1} parent=78 // loop_footer_branch
                  %531 = sbr.rel target = $region81
                $region86: #{tpu_custom_call.1} parent=78 // loop_exit
                  _
              $region79: #{tpu_custom_call.1} parent=63 // pred_fallthru
                _
              // Predicated region
              $region87: #{tpu_custom_call.1} parent=63 // pred_check
                _
              $region88: #{tpu_custom_call.1} parent=63 // pred_check_branch
                %548 = sbr.rel target = $region90
              $region89: #{tpu_custom_call.1} parent=63 // pred_region
                _
              $region90: #{tpu_custom_call.1} parent=63 // pred_fallthru
                _
            $region64: #{tpu_custom_call.1} parent=59 // pred_fallthru
              _
            // Predicated region
            $region65: #{tpu_custom_call.1} parent=59 // pred_check
              _
            $region66: #{tpu_custom_call.1} parent=59 // pred_check_branch
              %510 = sbr.rel target = $region68
            $region67: #{tpu_custom_call.1} parent=59 // pred_region
              %s512 = ssub.s32 256, 1
              loop: start=0, step=1, limit=1
              $region69: #{tpu_custom_call.1} parent=67 // loop_pre_header
                _
              $region70: #{tpu_custom_call.1} parent=67 // loop_header
                %s514 = sphi 0, %s518
                %p515 = scmp.ge.s32.totalorder %s514, 1
                %s519 = sphi %s489, %s489
                %s520 = sphi %s504, %s504
              $region71: #{tpu_custom_call.1} parent=67 // loop_header_branch
                %517 = sbr.rel (%p515) target = $region75
              $region72: #{tpu_custom_call.1} parent=67 // loop_body
                %v521 = vld [vmem:[%s519] sm:%s512]
                %522 = vst [vmem:[%s520] sm:%s512] %v521
                %v523 = vld [vmem:[%s519 + $0x8] sm:%s512]
                %524 = vst [vmem:[%s520 + $0x10] sm:%s512] %v523
                %v525 = vld [vmem:[%s519 + $0x10] sm:%s512]
                %526 = vst [vmem:[%s520 + $0x20] sm:%s512] %v525
                %v527 = vld [vmem:[%s519 + $0x18] sm:%s512]
                %528 = vst [vmem:[%s520 + $0x30] sm:%s512] %v527
              $region73: #{tpu_custom_call.1} parent=67 // loop_footer
                %s518 = sadd.s32 1, %s514
              $region74: #{tpu_custom_call.1} parent=67 // loop_footer_branch
                %513 = sbr.rel target = $region70
              $region75: #{tpu_custom_call.1} parent=67 // loop_exit
                _
            $region68: #{tpu_custom_call.1} parent=59 // pred_fallthru
              _
          $region60: #{tpu_custom_call.1} parent=55 // pred_fallthru
            _
          %549 = vnop
        $region56: #{tpu_custom_call.1} parent=39 // pred_fallthru
          _
        // Predicated region
        $region91: #{tpu_custom_call.1} parent=39 // pred_check
          %p550 = pneg %p195
        $region92: #{tpu_custom_call.1} parent=39 // pred_check_branch
          %552 = sbr.rel (%p550) target = $region94
        $region93: #{tpu_custom_call.1} parent=39 // pred_region
          %s553 = smul.addr %s27, 8
          %s554 = sadd.s32 %s28, %s553
          %s555 = smul.addr %s554, 8
          %s556 = scalar_lea.vmem %s6, %s555
          // Predicated region
          $region95: #{tpu_custom_call.1} parent=93 // pred_check
            _
          $region96: #{tpu_custom_call.1} parent=93 // pred_check_branch
            %558 = sbr.rel (0) target = $region98
          $region97: #{tpu_custom_call.1} parent=93 // pred_region
            // Predicated region
            $region99: #{tpu_custom_call.1} parent=97 // pred_check
              _
            $region100: #{tpu_custom_call.1} parent=97 // pred_check_branch
              %560 = sbr.rel (0) target = $region102
            $region101: #{tpu_custom_call.1} parent=97 // pred_region
              // Predicated region
              $region114: #{tpu_custom_call.1} parent=101 // pred_check
                _
              $region115: #{tpu_custom_call.1} parent=101 // pred_check_branch
                %582 = sbr.rel (0) target = $region117
              $region116: #{tpu_custom_call.1} parent=101 // pred_region
                loop: start=0, step=1, limit=1
                $region118: #{tpu_custom_call.1} parent=116 // loop_pre_header
                  _
                $region119: #{tpu_custom_call.1} parent=116 // loop_header
                  %s584 = sphi 0, %s588
                  %p585 = scmp.ge.s32.totalorder %s584, 1
                  %s589 = sphi %s493, %s493
                  %s590 = sphi %s556, %s556
                $region120: #{tpu_custom_call.1} parent=116 // loop_header_branch
                  %587 = sbr.rel (%p585) target = $region124
                $region121: #{tpu_custom_call.1} parent=116 // loop_body
                  %v591 = vld [vmem:[%s589] sm:$0xff]
                  %592 = vst [vmem:[%s590] sm:$0xff] %v591
                  %v593 = vld [vmem:[%s589 + $0x8] sm:$0xff]
                  %594 = vst [vmem:[%s590 + $0x10] sm:$0xff] %v593
                  %v595 = vld [vmem:[%s589 + $0x10] sm:$0xff]
                  %596 = vst [vmem:[%s590 + $0x20] sm:$0xff] %v595
                  %v597 = vld [vmem:[%s589 + $0x18] sm:$0xff]
                  %598 = vst [vmem:[%s590 + $0x30] sm:$0xff] %v597
                $region122: #{tpu_custom_call.1} parent=116 // loop_footer
                  %s588 = sadd.s32 1, %s584
                $region123: #{tpu_custom_call.1} parent=116 // loop_footer_branch
                  %583 = sbr.rel target = $region119
                $region124: #{tpu_custom_call.1} parent=116 // loop_exit
                  _
              $region117: #{tpu_custom_call.1} parent=101 // pred_fallthru
                _
              // Predicated region
              $region125: #{tpu_custom_call.1} parent=101 // pred_check
                _
              $region126: #{tpu_custom_call.1} parent=101 // pred_check_branch
                %600 = sbr.rel target = $region128
              $region127: #{tpu_custom_call.1} parent=101 // pred_region
                _
              $region128: #{tpu_custom_call.1} parent=101 // pred_fallthru
                _
            $region102: #{tpu_custom_call.1} parent=97 // pred_fallthru
              _
            // Predicated region
            $region103: #{tpu_custom_call.1} parent=97 // pred_check
              _
            $region104: #{tpu_custom_call.1} parent=97 // pred_check_branch
              %562 = sbr.rel target = $region106
            $region105: #{tpu_custom_call.1} parent=97 // pred_region
              %s564 = ssub.s32 256, 1
              loop: start=0, step=1, limit=1
              $region107: #{tpu_custom_call.1} parent=105 // loop_pre_header
                _
              $region108: #{tpu_custom_call.1} parent=105 // loop_header
                %s566 = sphi 0, %s570
                %p567 = scmp.ge.s32.totalorder %s566, 1
                %s571 = sphi %s493, %s493
                %s572 = sphi %s556, %s556
              $region109: #{tpu_custom_call.1} parent=105 // loop_header_branch
                %569 = sbr.rel (%p567) target = $region113
              $region110: #{tpu_custom_call.1} parent=105 // loop_body
                %v573 = vld [vmem:[%s571] sm:%s564]
                %574 = vst [vmem:[%s572] sm:%s564] %v573
                %v575 = vld [vmem:[%s571 + $0x8] sm:%s564]
                %576 = vst [vmem:[%s572 + $0x10] sm:%s564] %v575
                %v577 = vld [vmem:[%s571 + $0x10] sm:%s564]
                %578 = vst [vmem:[%s572 + $0x20] sm:%s564] %v577
                %v579 = vld [vmem:[%s571 + $0x18] sm:%s564]
                %580 = vst [vmem:[%s572 + $0x30] sm:%s564] %v579
              $region111: #{tpu_custom_call.1} parent=105 // loop_footer
                %s570 = sadd.s32 1, %s566
              $region112: #{tpu_custom_call.1} parent=105 // loop_footer_branch
                %565 = sbr.rel target = $region108
              $region113: #{tpu_custom_call.1} parent=105 // loop_exit
                _
            $region106: #{tpu_custom_call.1} parent=97 // pred_fallthru
              _
          $region98: #{tpu_custom_call.1} parent=93 // pred_fallthru
            _
          %601 = vnop
        $region94: #{tpu_custom_call.1} parent=39 // pred_fallthru
          _
        // Predicated region
        $region129: #{tpu_custom_call.1} parent=39 // pred_check
          %p602 = pneg %p223
        $region130: #{tpu_custom_call.1} parent=39 // pred_check_branch
          %604 = sbr.rel (%p602) target = $region132
        $region131: #{tpu_custom_call.1} parent=39 // pred_region
          %s605 = smul.addr %s27, 8
          %s606 = sadd.s32 %s28, %s605
          %s607 = smul.addr %s606, 8
          %s608 = scalar_lea.vmem %s7, %s607
          // Predicated region
          $region133: #{tpu_custom_call.1} parent=131 // pred_check
            _
          $region134: #{tpu_custom_call.1} parent=131 // pred_check_branch
            %610 = sbr.rel (0) target = $region136
          $region135: #{tpu_custom_call.1} parent=131 // pred_region
            // Predicated region
            $region137: #{tpu_custom_call.1} parent=135 // pred_check
              _
            $region138: #{tpu_custom_call.1} parent=135 // pred_check_branch
              %612 = sbr.rel (0) target = $region140
            $region139: #{tpu_custom_call.1} parent=135 // pred_region
              // Predicated region
              $region152: #{tpu_custom_call.1} parent=139 // pred_check
                _
              $region153: #{tpu_custom_call.1} parent=139 // pred_check_branch
                %634 = sbr.rel (0) target = $region155
              $region154: #{tpu_custom_call.1} parent=139 // pred_region
                loop: start=0, step=1, limit=1
                $region156: #{tpu_custom_call.1} parent=154 // loop_pre_header
                  _
                $region157: #{tpu_custom_call.1} parent=154 // loop_header
                  %s636 = sphi 0, %s640
                  %p637 = scmp.ge.s32.totalorder %s636, 1
                  %s641 = sphi %s497, %s497
                  %s642 = sphi %s608, %s608
                $region158: #{tpu_custom_call.1} parent=154 // loop_header_branch
                  %639 = sbr.rel (%p637) target = $region162
                $region159: #{tpu_custom_call.1} parent=154 // loop_body
                  %v643 = vld [vmem:[%s641] sm:$0xff]
                  %644 = vst [vmem:[%s642] sm:$0xff] %v643
                  %v645 = vld [vmem:[%s641 + $0x8] sm:$0xff]
                  %646 = vst [vmem:[%s642 + $0x10] sm:$0xff] %v645
                  %v647 = vld [vmem:[%s641 + $0x10] sm:$0xff]
                  %648 = vst [vmem:[%s642 + $0x20] sm:$0xff] %v647
                  %v649 = vld [vmem:[%s641 + $0x18] sm:$0xff]
                  %650 = vst [vmem:[%s642 + $0x30] sm:$0xff] %v649
                $region160: #{tpu_custom_call.1} parent=154 // loop_footer
                  %s640 = sadd.s32 1, %s636
                $region161: #{tpu_custom_call.1} parent=154 // loop_footer_branch
                  %635 = sbr.rel target = $region157
                $region162: #{tpu_custom_call.1} parent=154 // loop_exit
                  _
              $region155: #{tpu_custom_call.1} parent=139 // pred_fallthru
                _
              // Predicated region
              $region163: #{tpu_custom_call.1} parent=139 // pred_check
                _
              $region164: #{tpu_custom_call.1} parent=139 // pred_check_branch
                %652 = sbr.rel target = $region166
              $region165: #{tpu_custom_call.1} parent=139 // pred_region
                _
              $region166: #{tpu_custom_call.1} parent=139 // pred_fallthru
                _
            $region140: #{tpu_custom_call.1} parent=135 // pred_fallthru
              _
            // Predicated region
            $region141: #{tpu_custom_call.1} parent=135 // pred_check
              _
            $region142: #{tpu_custom_call.1} parent=135 // pred_check_branch
              %614 = sbr.rel target = $region144
            $region143: #{tpu_custom_call.1} parent=135 // pred_region
              %s616 = ssub.s32 256, 1
              loop: start=0, step=1, limit=1
              $region145: #{tpu_custom_call.1} parent=143 // loop_pre_header
                _
              $region146: #{tpu_custom_call.1} parent=143 // loop_header
                %s618 = sphi 0, %s622
                %p619 = scmp.ge.s32.totalorder %s618, 1
                %s623 = sphi %s497, %s497
                %s624 = sphi %s608, %s608
              $region147: #{tpu_custom_call.1} parent=143 // loop_header_branch
                %621 = sbr.rel (%p619) target = $region151
              $region148: #{tpu_custom_call.1} parent=143 // loop_body
                %v625 = vld [vmem:[%s623] sm:%s616]
                %626 = vst [vmem:[%s624] sm:%s616] %v625
                %v627 = vld [vmem:[%s623 + $0x8] sm:%s616]
                %628 = vst [vmem:[%s624 + $0x10] sm:%s616] %v627
                %v629 = vld [vmem:[%s623 + $0x10] sm:%s616]
                %630 = vst [vmem:[%s624 + $0x20] sm:%s616] %v629
                %v631 = vld [vmem:[%s623 + $0x18] sm:%s616]
                %632 = vst [vmem:[%s624 + $0x30] sm:%s616] %v631
              $region149: #{tpu_custom_call.1} parent=143 // loop_footer
                %s622 = sadd.s32 1, %s618
              $region150: #{tpu_custom_call.1} parent=143 // loop_footer_branch
                %617 = sbr.rel target = $region146
              $region151: #{tpu_custom_call.1} parent=143 // loop_exit
                _
            $region144: #{tpu_custom_call.1} parent=135 // pred_fallthru
              _
          $region136: #{tpu_custom_call.1} parent=131 // pred_fallthru
            _
          %653 = vnop
        $region132: #{tpu_custom_call.1} parent=39 // pred_fallthru
          _
      $region40: #{tpu_custom_call.1} parent=5 // pred_fallthru
        _
      %p654 = scmp.le.s32.totalorder 2, %s18
      // Predicated region
      $region167: #{tpu_custom_call.1} parent=5 // pred_check
        %p655 = pneg %p654
      $region168: #{tpu_custom_call.1} parent=5 // pred_check_branch
        %657 = sbr.rel (%p655) target = $region170
      $region169: #{tpu_custom_call.1} parent=5 // pred_region
        %s658 = ssub.s32 %s18, 2
        // Predicated region
        $region171: #{tpu_custom_call.1} parent=169 // pred_check
          %p659 = pneg %p173
        $region172: #{tpu_custom_call.1} parent=169 // pred_check_branch
          %661 = sbr.rel (%p659) target = $region174
        $region173: #{tpu_custom_call.1} parent=169 // pred_region
          %s662 = sand.u32 %s158, 1
          %s663 = sand.u32 %s158, 1
          %s664 = smul.addr %s663, 32
          %s665 = scalar_lea.vmem [#allocation7], %s664
        $region174: #{tpu_custom_call.1} parent=169 // pred_fallthru
          _
        // Predicated region
        $region175: #{tpu_custom_call.1} parent=169 // pred_check
          %p666 = pneg %p201
        $region176: #{tpu_custom_call.1} parent=169 // pred_check_branch
          %668 = sbr.rel (%p666) target = $region178
        $region177: #{tpu_custom_call.1} parent=169 // pred_region
          %s669 = sand.u32 %s186, 1
          %s670 = sand.u32 %s186, 1
          %s671 = smul.addr %s670, 32
          %s672 = scalar_lea.vmem [#allocation8], %s671
        $region178: #{tpu_custom_call.1} parent=169 // pred_fallthru
          _
        // Predicated region
        $region179: #{tpu_custom_call.1} parent=169 // pred_check
          %p673 = pneg %p229
        $region180: #{tpu_custom_call.1} parent=169 // pred_check_branch
          %675 = sbr.rel (%p673) target = $region182
        $region181: #{tpu_custom_call.1} parent=169 // pred_region
          %s676 = sand.u32 %s214, 1
          %s677 = sand.u32 %s214, 1
          %s678 = smul.addr %s677, 32
          %s679 = scalar_lea.vmem [#allocation9], %s678
        $region182: #{tpu_custom_call.1} parent=169 // pred_fallthru
          _
      $region170: #{tpu_custom_call.1} parent=5 // pred_fallthru
        _
    $region6: #{tpu_custom_call.1} parent=1 // loop_footer
      %s22 = sadd.s32 1, %s18
    $region7: #{tpu_custom_call.1} parent=1 // loop_footer_branch
      %17 = sbr.rel target = $region3
    $region8: #{tpu_custom_call.1} parent=1 // loop_exit
      _
    %680 = vsyncpa [#allocation3], 1
    %s681 = scalar_lea.sflag [#allocation3], 1
    %682 = vsyncpa %s681, 1
    %683 = vsyncpa [#allocation5], 1

// kernel: tpu_custom_call.1
$region0: #{tpu_custom_call.1}
  #allocation0 [shape = 'u32[]', space=smem, size = 0x4, offset = 0x4, fixed_abs, tag = 'smem constant byte address 0x4 - core index']
  #allocation1 [shape = 'u32[72,128]{1,0:T(1,128)}', space=vmem, size = 0x9000, scoped, tag = 'internal scratch']
  %s0 = inlined_call_operand.hbm [shape: f32[2,16,32], index: 0, kind: input, shape index: {}]
  %s1 = inlined_call_operand.hbm [shape: f32[1,32], index: 1, kind: input, shape index: {}]
  %s2 = inlined_call_operand.vmem [shape: f32[1,32], index: 2, kind: input, shape index: {}]
  %s3 = inlined_call_operand.hbm [shape: f32[32,96], index: 3, kind: input, shape index: {}]
  %s4 = inlined_call_operand.vmem [shape: f32[1,96], index: 4, kind: input, shape index: {}]
  %s5 = inlined_call_operand.vmem [shape: f32[2,4,16,8], index: 5, kind: output, shape index: {0}]
  %s6 = inlined_call_operand.vmem [shape: f32[2,4,16,8], index: 6, kind: output, shape index: {1}]
  %s7 = inlined_call_operand.vmem [shape: f32[2,4,16,8], index: 7, kind: output, shape index: {2}]
  %8 = xla_tuple %s5, %s6, %s7
  %s9 = sld [smem:[#allocation0]]
  $region183: #{tpu_custom_call.1} parent=0
    _
  %s11 = ssub.s32 1, %s9
  %s12 = scalar_select 0, %s11, %s9
  $region1: #{tpu_custom_call.1} parent=0
    #allocation2 [shape = 'u8[8192]{0}', space=vmem, size = 0x2000, scoped, tag = 'input window, operand 0']
    #allocation3 [shape = 's32[2]{0}', space=sflag, size = 0x8, scoped, tag = 'scoped memory for tpu_custom_call.1']
    #allocation4 [shape = 'u8[512]{0}', space=vmem, size = 0x400, scoped, tag = 'input window, operand 1, single buffered']
    #allocation5 [shape = 's32[1]{0}', space=sflag, size = 0x4, scoped, tag = 'scoped memory for tpu_custom_call.1']
    #allocation6 [shape = 'u8[16384]{0}', space=vmem, size = 0x4000, scoped, tag = 'input window, operand 3, single buffered']
    #allocation7 [shape = 'u8[32768]{0}', space=vmem, size = 0x8000, scoped, tag = 'output window, operand 0']
    #allocation8 [shape = 'u8[32768]{0}', space=vmem, size = 0x8000, scoped, tag = 'output window, operand 1']
    #allocation9 [shape = 'u8[32768]{0}', space=vmem, size = 0x8000, scoped, tag = 'output window, operand 2']
    %13 = vsyncpa [#allocation3], 0
    %s14 = scalar_lea.sflag [#allocation3], 1
    %15 = vsyncpa %s14, 0
    %16 = vsyncpa [#allocation5], 0
    loop: start=0, step=1, limit=6
    $region2: #{tpu_custom_call.1} parent=1 // loop_pre_header
      _
    $region3: #{tpu_custom_call.1} parent=1 // loop_header
      %s18 = sphi 0, %s22
      %p19 = scmp.ge.s32.totalorder %s18, 6
      %s25 = sphi 0, %s37
      %s26 = sphi 0, %s33
      %s27 = sphi 0, %s25
      %s28 = sphi 0, %s26
      %s29 = sphi 0, %s27
      %s30 = sphi 0, %s28
      %s42 = sphi 0, %s44
      %s45 = sphi 0, %s42
      %s46 = sphi 0, %s45
      %s62 = sphi 0, %s46
      %s66 = sphi 0, %s66
      %s68 = sphi 0, %s66
      %s69 = sphi 0, %s68
      %s83 = sphi 0, %s69
      %s87 = sphi 0, %s87
      %s89 = sphi 0, %s87
      %s90 = sphi 0, %s89
      %s104 = sphi 0, %s90
      %s108 = sphi 0, %s108
      %s110 = sphi 0, %s108
      %s111 = sphi 0, %s110
      %s125 = sphi 0, %s111
      %s129 = sphi 0, %s129
      %s131 = sphi 0, %s129
      %s132 = sphi 0, %s131
      %s146 = sphi 0, %s132
      %s154 = sphi 0, %s156
      %s157 = sphi 0, %s154
      %s158 = sphi 0, %s157
      %s174 = sphi 0, %s158
      %s182 = sphi 0, %s184
      %s185 = sphi 0, %s182
      %s186 = sphi 0, %s185
      %s202 = sphi 0, %s186
      %s210 = sphi 0, %s212
      %s213 = sphi 0, %s210
      %s214 = sphi 0, %s213
      %s230 = sphi 0, %s214
    $region4: #{tpu_custom_call.1} parent=1 // loop_header_branch
      %21 = sbr.rel (%p19) target = $region8
    $region5: #{tpu_custom_call.1} parent=1 // loop_body
      %s23 = ssub.s32 %s18, 1
      %s24 = ssub.s32 %s18, 2
      %s31 = sadd.s32 1, %s26
      %p32 = scmp.ge.s32.totalorder %s31, 2
      %s33 = scalar_select %p32, 0, %s31
      %s34 = sadd.s32 1, %s25
      %s35 = scalar_select %p32, %s34, %s25
      %p36 = scmp.ge.s32.totalorder %s35, 2
      %s37 = scalar_select %p36, 0, %s35
      %s38 = ssub.s32 %s25, %s37
      %s39 = ssub.s32 %s26, %s33
      %s40 = sor.u32 %s38, %s39
      %p41 = scmp.eq.s32.totalorder %s40, 0
      %s43 = sadd.s32 %s42, 1
      %s44 = scalar_select %p41, %s42, %s43
      %p47 = pneg %p41
      %p48 = scmp.eq.s32.totalorder %s18, 3
      %p49 = por %p47, %p48
      %p50 = scmp.ne.s32.totalorder %s42, %s45
      %p51 = scmp.eq.s32.totalorder %s18, 0
      %p52 = por %p50, %p51
      %p53 = scmp.ne.s32.totalorder %s42, %s45
      %p54 = scmp.eq.s32.totalorder %s23, 3
      %p55 = por %p53, %p54
      %p56 = scmp.ne.s32.totalorder %s45, %s46
      %p57 = scmp.eq.s32.totalorder %s23, 0
      %p58 = por %p56, %p57
      %p59 = scmp.ne.s32.totalorder %s45, %s46
      %p60 = scmp.eq.s32.totalorder %s24, 3
      %p61 = por %p59, %p60
      %p63 = scmp.ne.s32.totalorder %s46, %s62
      %p64 = scmp.eq.s32.totalorder %s24, 0
      %p65 = por %p63, %p64
      %s67 = sadd.s32 %s66, 1
      %p70 = scmp.eq.s32.totalorder %s18, 3
      %p71 = scmp.ne.s32.totalorder %s66, %s68
      %p72 = scmp.eq.s32.totalorder %s18, 0
      %p73 = por %p71, %p72
      %p74 = scmp.ne.s32.totalorder %s66, %s68
      %p75 = scmp.eq.s32.totalorder %s23, 3
      %p76 = por %p74, %p75
      %p77 = scmp.ne.s32.totalorder %s68, %s69
      %p78 = scmp.eq.s32.totalorder %s23, 0
      %p79 = por %p77, %p78
      %p80 = scmp.ne.s32.totalorder %s68, %s69
      %p81 = scmp.eq.s32.totalorder %s24, 3
      %p82 = por %p80, %p81
      %p84 = scmp.ne.s32.totalorder %s69, %s83
      %p85 = scmp.eq.s32.totalorder %s24, 0
      %p86 = por %p84, %p85
      %s88 = sadd.s32 %s87, 1
      %p91 = scmp.eq.s32.totalorder %s18, 3
      %p92 = scmp.ne.s32.totalorder %s87, %s89
      %p93 = scmp.eq.s32.totalorder %s18, 0
      %p94 = por %p92, %p93
      %p95 = scmp.ne.s32.totalorder %s87, %s89
      %p96 = scmp.eq.s32.totalorder %s23, 3
      %p97 = por %p95, %p96
      %p98 = scmp.ne.s32.totalorder %s89, %s90
      %p99 = scmp.eq.s32.totalorder %s23, 0
      %p100 = por %p98, %p99
      %p101 = scmp.ne.s32.totalorder %s89, %s90
      %p102 = scmp.eq.s32.totalorder %s24, 3
      %p103 = por %p101, %p102
      %p105 = scmp.ne.s32.totalorder %s90, %s104
      %p106 = scmp.eq.s32.totalorder %s24, 0
      %p107 = por %p105, %p106
      %s109 = sadd.s32 %s108, 1
      %p112 = scmp.eq.s32.totalorder %s18, 3
      %p113 = scmp.ne.s32.totalorder %s108, %s110
      %p114 = scmp.eq.s32.totalorder %s18, 0
      %p115 = por %p113, %p114
      %p116 = scmp.ne.s32.totalorder %s108, %s110
      %p117 = scmp.eq.s32.totalorder %s23, 3
      %p118 = por %p116, %p117
      %p119 = scmp.ne.s32.totalorder %s110, %s111
      %p120 = scmp.eq.s32.totalorder %s23, 0
      %p121 = por %p119, %p120
      %p122 = scmp.ne.s32.totalorder %s110, %s111
      %p123 = scmp.eq.s32.totalorder %s24, 3
      %p124 = por %p122, %p123
      %p126 = scmp.ne.s32.totalorder %s111, %s125
      %p127 = scmp.eq.s32.totalorder %s24, 0
      %p128 = por %p126, %p127
      %s130 = sadd.s32 %s129, 1
      %p133 = scmp.eq.s32.totalorder %s18, 3
      %p134 = scmp.ne.s32.totalorder %s129, %s131
      %p135 = scmp.eq.s32.totalorder %s18, 0
      %p136 = por %p134, %p135
      %p137 = scmp.ne.s32.totalorder %s129, %s131
      %p138 = scmp.eq.s32.totalorder %s23, 3
      %p139 = por %p137, %p138
      %p140 = scmp.ne.s32.totalorder %s131, %s132
      %p141 = scmp.eq.s32.totalorder %s23, 0
      %p142 = por %p140, %p141
      %p143 = scmp.ne.s32.totalorder %s131, %s132
      %p144 = scmp.eq.s32.totalorder %s24, 3
      %p145 = por %p143, %p144
      %p147 = scmp.ne.s32.totalorder %s132, %s146
      %p148 = scmp.eq.s32.totalorder %s24, 0
      %p149 = por %p147, %p148
      %s150 = ssub.s32 %s25, %s37
      %s151 = ssub.s32 %s26, %s33
      %s152 = sor.u32 %s150, %s151
      %p153 = scmp.eq.s32.totalorder %s152, 0
      %s155 = sadd.s32 %s154, 1
      %s156 = scalar_select %p153, %s154, %s155
      %p159 = pneg %p153
      %p160 = scmp.eq.s32.totalorder %s18, 3
      %p161 = por %p159, %p160
      %p162 = scmp.ne.s32.totalorder %s154, %s157
      %p163 = scmp.eq.s32.totalorder %s18, 0
      %p164 = por %p162, %p163
      %p165 = scmp.ne.s32.totalorder %s154, %s157
      %p166 = scmp.eq.s32.totalorder %s23, 3
      %p167 = por %p165, %p166
      %p168 = scmp.ne.s32.totalorder %s157, %s158
      %p169 = scmp.eq.s32.totalorder %s23, 0
      %p170 = por %p168, %p169
      %p171 = scmp.ne.s32.totalorder %s157, %s158
      %p172 = scmp.eq.s32.totalorder %s24, 3
      %p173 = por %p171, %p172
      %p175 = scmp.ne.s32.totalorder %s158, %s174
      %p176 = scmp.eq.s32.totalorder %s24, 0
      %p177 = por %p175, %p176
      %s178 = ssub.s32 %s25, %s37
      %s179 = ssub.s32 %s26, %s33
      %s180 = sor.u32 %s178, %s179
      %p181 = scmp.eq.s32.totalorder %s180, 0
      %s183 = sadd.s32 %s182, 1
      %s184 = scalar_select %p181, %s182, %s183
      %p187 = pneg %p181
      %p188 = scmp.eq.s32.totalorder %s18, 3
      %p189 = por %p187, %p188
      %p190 = scmp.ne.s32.totalorder %s182, %s185
      %p191 = scmp.eq.s32.totalorder %s18, 0
      %p192 = por %p190, %p191
      %p193 = scmp.ne.s32.totalorder %s182, %s185
      %p194 = scmp.eq.s32.totalorder %s23, 3
      %p195 = por %p193, %p194
      %p196 = scmp.ne.s32.totalorder %s185, %s186
      %p197 = scmp.eq.s32.totalorder %s23, 0
      %p198 = por %p196, %p197
      %p199 = scmp.ne.s32.totalorder %s185, %s186
      %p200 = scmp.eq.s32.totalorder %s24, 3
      %p201 = por %p199, %p200
      %p203 = scmp.ne.s32.totalorder %s186, %s202
      %p204 = scmp.eq.s32.totalorder %s24, 0
      %p205 = por %p203, %p204
      %s206 = ssub.s32 %s25, %s37
      %s207 = ssub.s32 %s26, %s33
      %s208 = sor.u32 %s206, %s207
      %p209 = scmp.eq.s32.totalorder %s208, 0
      %s211 = sadd.s32 %s210, 1
      %s212 = scalar_select %p209, %s210, %s211
      %p215 = pneg %p209
      %p216 = scmp.eq.s32.totalorder %s18, 3
      %p217 = por %p215, %p216
      %p218 = scmp.ne.s32.totalorder %s210, %s213
      %p219 = scmp.eq.s32.totalorder %s18, 0
      %p220 = por %p218, %p219
      %p221 = scmp.ne.s32.totalorder %s210, %s213
      %p222 = scmp.eq.s32.totalorder %s23, 3
      %p223 = por %p221, %p222
      %p224 = scmp.ne.s32.totalorder %s213, %s214
      %p225 = scmp.eq.s32.totalorder %s23, 0
      %p226 = por %p224, %p225
      %p227 = scmp.ne.s32.totalorder %s213, %s214
      %p228 = scmp.eq.s32.totalorder %s24, 3
      %p229 = por %p227, %p228
      %p231 = scmp.ne.s32.totalorder %s214, %s230
      %p232 = scmp.eq.s32.totalorder %s24, 0
      %p233 = por %p231, %p232
      %p234 = scmp.le.s32.totalorder 1, %s18
      %p235 = scmp.lt.s32.totalorder %s18, 5
      %p236 = pnand %p234, %p235
      %p237 = pneg %p236
      // Predicated region
      $region9: #{tpu_custom_call.1} parent=5 // pred_check
        _
      $region10: #{tpu_custom_call.1} parent=5 // pred_check_branch
        %239 = sbr.rel (%p236) target = $region12
      $region11: #{tpu_custom_call.1} parent=5 // pred_region
        %s240 = ssub.s32 %s18, 1
        // Predicated region
        $region13: #{tpu_custom_call.1} parent=11 // pred_check
          %p241 = pneg %p79
        $region14: #{tpu_custom_call.1} parent=11 // pred_check_branch
          %243 = sbr.rel (%p241) target = $region16
        $region15: #{tpu_custom_call.1} parent=11 // pred_region
          %245 = vsyncadd [#allocation5], 0
          %s247 = sshll.u32 %s1, 4
          %s248 = int_to_ptr.hbm [resolvable:$true] %s247
          %s249 = sshll.u32 [#allocation4], 4
          %s250 = int_to_ptr.vmem [resolvable:$true] %s249
          %252 = dma.hbm_to_vmem [thread:$0]  %s248, 16, %s250, [#allocation5]
        $region16: #{tpu_custom_call.1} parent=11 // pred_fallthru
          _
        // Predicated region
        $region17: #{tpu_custom_call.1} parent=11 // pred_check
          %p253 = pneg %p100
        $region18: #{tpu_custom_call.1} parent=11 // pred_check_branch
          %255 = sbr.rel (%p253) target = $region20
        $region19: #{tpu_custom_call.1} parent=11 // pred_region
          _
        $region20: #{tpu_custom_call.1} parent=11 // pred_fallthru
          _
        // Predicated region
        $region21: #{tpu_custom_call.1} parent=11 // pred_check
          %p256 = pneg %p121
        $region22: #{tpu_custom_call.1} parent=11 // pred_check_branch
          %258 = sbr.rel (%p256) target = $region24
        $region23: #{tpu_custom_call.1} parent=11 // pred_region
          %260 = vsyncadd [#allocation5], 0
          %s261 = sshll.u32 %s3, 4
          %s262 = int_to_ptr.hbm [resolvable:$true] %s261
          %s263 = sshll.u32 [#allocation6], 4
          %s264 = int_to_ptr.vmem [resolvable:$true] %s263
          %269 = dma.hbm_to_vmem [thread:$0]  %s262, 512, %s264, [#allocation5], 128, 128, 8
        $region24: #{tpu_custom_call.1} parent=11 // pred_fallthru
          _
        // Predicated region
        $region25: #{tpu_custom_call.1} parent=11 // pred_check
          %p270 = pneg %p142
        $region26: #{tpu_custom_call.1} parent=11 // pred_check_branch
          %272 = sbr.rel (%p270) target = $region28
        $region27: #{tpu_custom_call.1} parent=11 // pred_region
          _
        $region28: #{tpu_custom_call.1} parent=11 // pred_fallthru
          _
      $region12: #{tpu_custom_call.1} parent=5 // pred_fallthru
        _
      %p273 = scmp.lt.s32.totalorder %s18, 4
      // Predicated region
      $region29: #{tpu_custom_call.1} parent=5 // pred_check
        %p274 = pneg %p273
      $region30: #{tpu_custom_call.1} parent=5 // pred_check_branch
        %276 = sbr.rel (%p274) target = $region32
      $region31: #{tpu_custom_call.1} parent=5 // pred_region
        // Predicated region
        $region33: #{tpu_custom_call.1} parent=31 // pred_check
          %p277 = pneg %p52
        $region34: #{tpu_custom_call.1} parent=31 // pred_check_branch
          %279 = sbr.rel (%p277) target = $region36
        $region35: #{tpu_custom_call.1} parent=31 // pred_region
          %s280 = sand.u32 %s42, 1
          %s281 = scalar_lea.sflag [#allocation3], %s280
          %s282 = sand.u32 %s42, 1
          %s283 = smul.addr %s282, 8
          %s284 = scalar_lea.vmem [#allocation2], %s283
          %286 = vsyncadd %s281, 0
          %s287 = smul.addr %s25, 2
          %s288 = sadd.s32 %s26, %s287
          %s289 = smul.addr %s288, 8
          %s290 = scalar_lea.hbm %s0, %s289
          %s292 = sshll.u32 %s290, 4
          %s293 = int_to_ptr.hbm [resolvable:$true] %s292
          %s294 = sshll.u32 %s284, 4
          %s295 = int_to_ptr.vmem [resolvable:$true] %s294
          %297 = dma.hbm_to_vmem [thread:$0]  %s293, 128, %s295, %s281
        $region36: #{tpu_custom_call.1} parent=31 // pred_fallthru
          _
      $region32: #{tpu_custom_call.1} parent=5 // pred_fallthru
        _
      %p298 = scmp.le.s32.totalorder 1, %s18
      %p299 = scmp.lt.s32.totalorder %s18, 5
      %p300 = pnand %p298, %p299
      %p301 = pneg %p300
      // Predicated region
      $region37: #{tpu_custom_call.1} parent=5 // pred_check
        _
      $region38: #{tpu_custom_call.1} parent=5 // pred_check_branch
        %303 = sbr.rel (%p300) target = $region40
      $region39: #{tpu_custom_call.1} parent=5 // pred_region
        %s304 = ssub.s32 %s18, 1
        %s305 = sand.u32 %s45, 1
        %s306 = scalar_lea.sflag [#allocation3], %s305
        %s307 = sand.u32 %s45, 1
        %s308 = smul.addr %s307, 8
        %s309 = scalar_lea.vmem [#allocation2], %s308
        // Predicated region
        $region41: #{tpu_custom_call.1} parent=39 // pred_check
          %p310 = pneg %p58
        $region42: #{tpu_custom_call.1} parent=39 // pred_check_branch
          %312 = sbr.rel (%p310) target = $region44
        $region43: #{tpu_custom_call.1} parent=39 // pred_region
          %314 = dma.done %s306, 128
        $region44: #{tpu_custom_call.1} parent=39 // pred_fallthru
          _
        // Predicated region
        $region45: #{tpu_custom_call.1} parent=39 // pred_check
          %p315 = pneg %p79
        $region46: #{tpu_custom_call.1} parent=39 // pred_check_branch
          %317 = sbr.rel (%p315) target = $region48
        $region47: #{tpu_custom_call.1} parent=39 // pred_region
          %319 = dma.done [#allocation5], 16
        $region48: #{tpu_custom_call.1} parent=39 // pred_fallthru
          _
        // Predicated region
        $region49: #{tpu_custom_call.1} parent=39 // pred_check
          %p320 = pneg %p121
        $region50: #{tpu_custom_call.1} parent=39 // pred_check_branch
          %322 = sbr.rel (%p320) target = $region52
        $region51: #{tpu_custom_call.1} parent=39 // pred_region
          %324 = dma.done [#allocation5], 512
        $region52: #{tpu_custom_call.1} parent=39 // pred_fallthru
          _
        %s325 = sand.u32 %s45, 1
        %s326 = scalar_lea.sflag [#allocation3], %s325
        %s327 = sand.u32 %s45, 1
        %s328 = smul.addr %s327, 8
        %s329 = scalar_lea.vmem [#allocation2], %s328
        %p330 = pneg %p58
        %p331 = pneg %p55
        %p332 = pneg %p79
        %p333 = pneg %p76
        %p334 = pneg %p100
        %p335 = pneg %p97
        %p336 = pneg %p121
        %p337 = pneg %p118
        %p338 = pneg %p142
        %p339 = pneg %p139
        %p340 = pneg %p170
        %p341 = pneg %p167
        %s342 = sand.u32 %s157, 1
        %s343 = sand.u32 %s157, 1
        %s344 = smul.addr %s343, 32
        %s345 = scalar_lea.vmem [#allocation7], %s344
        %p346 = pneg %p198
        %p347 = pneg %p195
        %s348 = sand.u32 %s185, 1
        %s349 = sand.u32 %s185, 1
        %s350 = smul.addr %s349, 32
        %s351 = scalar_lea.vmem [#allocation8], %s350
        %p352 = pneg %p226
        %p353 = pneg %p223
        %s354 = sand.u32 %s213, 1
        %s355 = sand.u32 %s213, 1
        %s356 = smul.addr %s355, 32
        %s357 = scalar_lea.vmem [#allocation9], %s356
        %v358 = vld [vmem:[%s309] sm:$0xff]
        %v359 = vld [vmem:[#allocation4] sm:$0x1]
        %v360 = vld [vmem:[%s2] sm:$0x1]
        %vm361 = vcmask 261120
        %v362 = vsel %vm361, %v358, 0.0
        %363 = vadd.xlane.f32.xlu0 %v362
        %v364 = vpop.xlane.xlu0 %363
        %v365 = vrcp.pop 32.0
        %v366 = vmul.f32 32.0, %v365
        %v367 = vsub.f32 1.0, %v366
        %v368 = vmul.f32 %v365, %v367
        %v369 = vadd.f32 %v365, %v368
        %vm370 = vweird.f32 %v365
        %v371 = vsel %vm370, %v365, %v369
        %v372 = vmul.f32 %v364, %v371
        %v373 = vsub.f32 %v358, %v372
        %v374 = vmul.f32 %v373, %v373
        %v375 = vsel %vm361, %v374, 0.0
        %376 = vadd.xlane.f32.xlu0 %v375
        %v377 = vpop.xlane.xlu0 %376
        %v378 = vmul.f32 %v377, %v371
        %v379 = vadd.f32 %v378, 1e-05
        %v380 = vrsqrt.pop %v379
        %v381 = vmul.f32 %v380, %v379
        %v382 = vmul.f32 %v381, %v380
        %v383 = vmul.f32 0.5, %v382
        %v384 = vsub.f32 1.5, %v383
        %v385 = vmul.f32 %v380, %v384
        %vm386 = vweird.f32 %v379
        %vm387 = vweird.f32 %v380
        %vm388 = vmor %vm386, %vm387
        %v389 = vsel %vm388, %v380, %v385
        %v390 = vmul.f32 %v373, %v389
        %v392 = vperm.slane %v359, 0
        %v394 = vmul.f32 %v390, %v392
        %v396 = vperm.slane %v360, 0
        %v398 = vadd.f32 %v394, %v396
        %v399 = vld [vmem:[#allocation6] sm:$0xff]
        %v400 = vld [vmem:[#allocation6 + $0x8] sm:$0xff]
        %v401 = vld [vmem:[#allocation6 + $0x10] sm:$0xff]
        %v402 = vld [vmem:[#allocation6 + $0x18] sm:$0xff]
        %v403 = vld [vmem:[%s4] sm:$0x1]
        %v405 = vperm.slane %v403, 0
        %v408 = vsel %vm361, %v398, 0
        %410 = vmatpush.msra.mxu0 0.0
        %411 = vmatpush.msra.mxu0 0.0
        %412 = vmatpush.msra.mxu0 0.0
        %413 = vmatpush.msra.mxu0 0.0
        %414 = vmatpush.msra.mxu0 0.0
        %415 = vmatpush.msra.mxu0 0.0
        %416 = vmatpush.msra.mxu0 0.0
        %417 = vmatpush.msra.mxu0 0.0
        %418 = vmatpush.msra.mxu0 0.0
        %419 = vmatpush.msra.mxu0 0.0
        %420 = vmatpush.msra.mxu0 0.0
        %421 = vmatpush.msra.mxu0 0.0
        %422 = vmatpush.msra.mxu0 %v402
        %423 = vmatpush.msra.mxu0 %v401
        %424 = vmatpush.msra.mxu0 %v400
        %425 = vmatpush.msra.mxu0 %v399
        %426 = vmatmul.f32.gmra.mxu0 %v408
        %v427 = vpop.f32.mrf.mxu0
        %v428 = vadd.f32 %v405, %v427
        %429 = vdwg.mxu0
        %vm430 = vcmask 64512
        %431 = vst.msk [vmem:[%s345] sm:$0xff] %vm430, %v428
        %433 = vrot.lane.b32.xlu0 %v428, 96
        %v434 = vpop.permute.xlu0 %433
        %436 = vst.msk [vmem:[%s351] sm:$0xff] %vm430, %v434
        %437 = vrot.lane.b32.xlu0 %v428, 64
        %v438 = vpop.permute.xlu0 %437
        %440 = vst.msk [vmem:[%s357] sm:$0xff] %vm430, %v438
        %441 = vrot.lane.b32.xlu0 %v428, 120
        %v442 = vpop.permute.xlu0 %441
        %s444 = scalar_lea.vmem %s345, 8 [#allocation7]
        %445 = vst.msk [vmem:[%s444] sm:$0xff] %vm430, %v442
        %446 = vrot.lane.b32.xlu0 %v428, 88
        %v447 = vpop.permute.xlu0 %446
        %s449 = scalar_lea.vmem %s351, 8 [#allocation8]
        %450 = vst.msk [vmem:[%s449] sm:$0xff] %vm430, %v447
        %451 = vrot.lane.b32.xlu0 %v428, 56
        %v452 = vpop.permute.xlu0 %451
        %s454 = scalar_lea.vmem %s357, 8 [#allocation9]
        %455 = vst.msk [vmem:[%s454] sm:$0xff] %vm430, %v452
        %456 = vrot.lane.b32.xlu0 %v428, 112
        %v457 = vpop.permute.xlu0 %456
        %s459 = scalar_lea.vmem %s345, 16 [#allocation7]
        %460 = vst.msk [vmem:[%s459] sm:$0xff] %vm430, %v457
        %461 = vrot.lane.b32.xlu0 %v428, 80
        %v462 = vpop.permute.xlu0 %461
        %s464 = scalar_lea.vmem %s351, 16 [#allocation8]
        %465 = vst.msk [vmem:[%s464] sm:$0xff] %vm430, %v462
        %466 = vrot.lane.b32.xlu0 %v428, 48
        %v467 = vpop.permute.xlu0 %466
        %s469 = scalar_lea.vmem %s357, 16 [#allocation9]
        %470 = vst.msk [vmem:[%s469] sm:$0xff] %vm430, %v467
        %471 = vrot.lane.b32.xlu0 %v428, 104
        %v472 = vpop.permute.xlu0 %471
        %s474 = scalar_lea.vmem %s345, 24 [#allocation7]
        %475 = vst.msk [vmem:[%s474] sm:$0xff] %vm430, %v472
        %476 = vrot.lane.b32.xlu0 %v428, 72
        %v477 = vpop.permute.xlu0 %476
        %s479 = scalar_lea.vmem %s351, 24 [#allocation8]
        %480 = vst.msk [vmem:[%s479] sm:$0xff] %vm430, %v477
        %481 = vrot.lane.b32.xlu0 %v428, 40
        %v482 = vpop.permute.xlu0 %481
        %s484 = scalar_lea.vmem %s357, 24 [#allocation9]
        %485 = vst.msk [vmem:[%s484] sm:$0xff] %vm430, %v482
        %s486 = sand.u32 %s157, 1
        %s487 = sand.u32 %s157, 1
        %s488 = smul.addr %s487, 32
        %s489 = scalar_lea.vmem [#allocation7], %s488
        %s490 = sand.u32 %s185, 1
        %s491 = sand.u32 %s185, 1
        %s492 = smul.addr %s491, 32
        %s493 = scalar_lea.vmem [#allocation8], %s492
        %s494 = sand.u32 %s213, 1
        %s495 = sand.u32 %s213, 1
        %s496 = smul.addr %s495, 32
        %s497 = scalar_lea.vmem [#allocation9], %s496
        // Predicated region
        $region53: #{tpu_custom_call.1} parent=39 // pred_check
          %p498 = pneg %p167
        $region54: #{tpu_custom_call.1} parent=39 // pred_check_branch
          %500 = sbr.rel (%p498) target = $region56
        $region55: #{tpu_custom_call.1} parent=39 // pred_region
          %s501 = smul.addr %s27, 8
          %s502 = sadd.s32 %s28, %s501
          %s503 = smul.addr %s502, 8
          %s504 = scalar_lea.vmem %s5, %s503
          // Predicated region
          $region57: #{tpu_custom_call.1} parent=55 // pred_check
            _
          $region58: #{tpu_custom_call.1} parent=55 // pred_check_branch
            %506 = sbr.rel (0) target = $region60
          $region59: #{tpu_custom_call.1} parent=55 // pred_region
            // Predicated region
            $region61: #{tpu_custom_call.1} parent=59 // pred_check
              _
            $region62: #{tpu_custom_call.1} parent=59 // pred_check_branch
              %508 = sbr.rel (0) target = $region64
            $region63: #{tpu_custom_call.1} parent=59 // pred_region
              // Predicated region
              $region76: #{tpu_custom_call.1} parent=63 // pred_check
                _
              $region77: #{tpu_custom_call.1} parent=63 // pred_check_branch
                %530 = sbr.rel (0) target = $region79
              $region78: #{tpu_custom_call.1} parent=63 // pred_region
                loop: start=0, step=1, limit=1
                $region80: #{tpu_custom_call.1} parent=78 // loop_pre_header
                  _
                $region81: #{tpu_custom_call.1} parent=78 // loop_header
                  %s532 = sphi 0, %s536
                  %p533 = scmp.ge.s32.totalorder %s532, 1
                  %s537 = sphi %s489, %s489
                  %s538 = sphi %s504, %s504
                $region82: #{tpu_custom_call.1} parent=78 // loop_header_branch
                  %535 = sbr.rel (%p533) target = $region86
                $region83: #{tpu_custom_call.1} parent=78 // loop_body
                  %v539 = vld [vmem:[%s537] sm:$0xff]
                  %540 = vst [vmem:[%s538] sm:$0xff] %v539
                  %v541 = vld [vmem:[%s537 + $0x8] sm:$0xff]
                  %542 = vst [vmem:[%s538 + $0x10] sm:$0xff] %v541
                  %v543 = vld [vmem:[%s537 + $0x10] sm:$0xff]
                  %544 = vst [vmem:[%s538 + $0x20] sm:$0xff] %v543
                  %v545 = vld [vmem:[%s537 + $0x18] sm:$0xff]
                  %546 = vst [vmem:[%s538 + $0x30] sm:$0xff] %v545
                $region84: #{tpu_custom_call.1} parent=78 // loop_footer
                  %s536 = sadd.s32 1, %s532
                $region85: #{tpu_custom_call.1} parent=78 // loop_footer_branch
                  %531 = sbr.rel target = $region81
                $region86: #{tpu_custom_call.1} parent=78 // loop_exit
                  _
              $region79: #{tpu_custom_call.1} parent=63 // pred_fallthru
                _
              // Predicated region
              $region87: #{tpu_custom_call.1} parent=63 // pred_check
                _
              $region88: #{tpu_custom_call.1} parent=63 // pred_check_branch
                %548 = sbr.rel target = $region90
              $region89: #{tpu_custom_call.1} parent=63 // pred_region
                _
              $region90: #{tpu_custom_call.1} parent=63 // pred_fallthru
                _
            $region64: #{tpu_custom_call.1} parent=59 // pred_fallthru
              _
            // Predicated region
            $region65: #{tpu_custom_call.1} parent=59 // pred_check
              _
            $region66: #{tpu_custom_call.1} parent=59 // pred_check_branch
              %510 = sbr.rel target = $region68
            $region67: #{tpu_custom_call.1} parent=59 // pred_region
              %s512 = ssub.s32 256, 1
              loop: start=0, step=1, limit=1
              $region69: #{tpu_custom_call.1} parent=67 // loop_pre_header
                _
              $region70: #{tpu_custom_call.1} parent=67 // loop_header
                %s514 = sphi 0, %s518
                %p515 = scmp.ge.s32.totalorder %s514, 1
                %s519 = sphi %s489, %s489
                %s520 = sphi %s504, %s504
              $region71: #{tpu_custom_call.1} parent=67 // loop_header_branch
                %517 = sbr.rel (%p515) target = $region75
              $region72: #{tpu_custom_call.1} parent=67 // loop_body
                %v521 = vld [vmem:[%s519] sm:%s512]
                %522 = vst [vmem:[%s520] sm:%s512] %v521
                %v523 = vld [vmem:[%s519 + $0x8] sm:%s512]
                %524 = vst [vmem:[%s520 + $0x10] sm:%s512] %v523
                %v525 = vld [vmem:[%s519 + $0x10] sm:%s512]
                %526 = vst [vmem:[%s520 + $0x20] sm:%s512] %v525
                %v527 = vld [vmem:[%s519 + $0x18] sm:%s512]
                %528 = vst [vmem:[%s520 + $0x30] sm:%s512] %v527
              $region73: #{tpu_custom_call.1} parent=67 // loop_footer
                %s518 = sadd.s32 1, %s514
              $region74: #{tpu_custom_call.1} parent=67 // loop_footer_branch
                %513 = sbr.rel target = $region70
              $region75: #{tpu_custom_call.1} parent=67 // loop_exit
                _
            $region68: #{tpu_custom_call.1} parent=59 // pred_fallthru
              _
          $region60: #{tpu_custom_call.1} parent=55 // pred_fallthru
            _
          %549 = vnop
        $region56: #{tpu_custom_call.1} parent=39 // pred_fallthru
          _
        // Predicated region
        $region91: #{tpu_custom_call.1} parent=39 // pred_check
          %p550 = pneg %p195
        $region92: #{tpu_custom_call.1} parent=39 // pred_check_branch
          %552 = sbr.rel (%p550) target = $region94
        $region93: #{tpu_custom_call.1} parent=39 // pred_region
          %s553 = smul.addr %s27, 8
          %s554 = sadd.s32 %s28, %s553
          %s555 = smul.addr %s554, 8
          %s556 = scalar_lea.vmem %s6, %s555
          // Predicated region
          $region95: #{tpu_custom_call.1} parent=93 // pred_check
            _
          $region96: #{tpu_custom_call.1} parent=93 // pred_check_branch
            %558 = sbr.rel (0) target = $region98
          $region97: #{tpu_custom_call.1} parent=93 // pred_region
            // Predicated region
            $region99: #{tpu_custom_call.1} parent=97 // pred_check
              _
            $region100: #{tpu_custom_call.1} parent=97 // pred_check_branch
              %560 = sbr.rel (0) target = $region102
            $region101: #{tpu_custom_call.1} parent=97 // pred_region
              // Predicated region
              $region114: #{tpu_custom_call.1} parent=101 // pred_check
                _
              $region115: #{tpu_custom_call.1} parent=101 // pred_check_branch
                %582 = sbr.rel (0) target = $region117
              $region116: #{tpu_custom_call.1} parent=101 // pred_region
                loop: start=0, step=1, limit=1
                $region118: #{tpu_custom_call.1} parent=116 // loop_pre_header
                  _
                $region119: #{tpu_custom_call.1} parent=116 // loop_header
                  %s584 = sphi 0, %s588
                  %p585 = scmp.ge.s32.totalorder %s584, 1
                  %s589 = sphi %s493, %s493
                  %s590 = sphi %s556, %s556
                $region120: #{tpu_custom_call.1} parent=116 // loop_header_branch
                  %587 = sbr.rel (%p585) target = $region124
                $region121: #{tpu_custom_call.1} parent=116 // loop_body
                  %v591 = vld [vmem:[%s589] sm:$0xff]
                  %592 = vst [vmem:[%s590] sm:$0xff] %v591
                  %v593 = vld [vmem:[%s589 + $0x8] sm:$0xff]
                  %594 = vst [vmem:[%s590 + $0x10] sm:$0xff] %v593
                  %v595 = vld [vmem:[%s589 + $0x10] sm:$0xff]
                  %596 = vst [vmem:[%s590 + $0x20] sm:$0xff] %v595
                  %v597 = vld [vmem:[%s589 + $0x18] sm:$0xff]
                  %598 = vst [vmem:[%s590 + $0x30] sm:$0xff] %v597
                $region122: #{tpu_custom_call.1} parent=116 // loop_footer
                  %s588 = sadd.s32 1, %s584
                $region123: #{tpu_custom_call.1} parent=116 // loop_footer_branch
                  %583 = sbr.rel target = $region119
                $region124: #{tpu_custom_call.1} parent=116 // loop_exit
                  _
              $region117: #{tpu_custom_call.1} parent=101 // pred_fallthru
                _
              // Predicated region
              $region125: #{tpu_custom_call.1} parent=101 // pred_check
                _
              $region126: #{tpu_custom_call.1} parent=101 // pred_check_branch
                %600 = sbr.rel target = $region128
              $region127: #{tpu_custom_call.1} parent=101 // pred_region
                _
              $region128: #{tpu_custom_call.1} parent=101 // pred_fallthru
                _
            $region102: #{tpu_custom_call.1} parent=97 // pred_fallthru
              _
            // Predicated region
            $region103: #{tpu_custom_call.1} parent=97 // pred_check
              _
            $region104: #{tpu_custom_call.1} parent=97 // pred_check_branch
              %562 = sbr.rel target = $region106
            $region105: #{tpu_custom_call.1} parent=97 // pred_region
              %s564 = ssub.s32 256, 1
              loop: start=0, step=1, limit=1
              $region107: #{tpu_custom_call.1} parent=105 // loop_pre_header
                _
              $region108: #{tpu_custom_call.1} parent=105 // loop_header
                %s566 = sphi 0, %s570
                %p567 = scmp.ge.s32.totalorder %s566, 1
                %s571 = sphi %s493, %s493
                %s572 = sphi %s556, %s556
              $region109: #{tpu_custom_call.1} parent=105 // loop_header_branch
                %569 = sbr.rel (%p567) target = $region113
              $region110: #{tpu_custom_call.1} parent=105 // loop_body
                %v573 = vld [vmem:[%s571] sm:%s564]
                %574 = vst [vmem:[%s572] sm:%s564] %v573
                %v575 = vld [vmem:[%s571 + $0x8] sm:%s564]
                %576 = vst [vmem:[%s572 + $0x10] sm:%s564] %v575
                %v577 = vld [vmem:[%s571 + $0x10] sm:%s564]
                %578 = vst [vmem:[%s572 + $0x20] sm:%s564] %v577
                %v579 = vld [vmem:[%s571 + $0x18] sm:%s564]
                %580 = vst [vmem:[%s572 + $0x30] sm:%s564] %v579
              $region111: #{tpu_custom_call.1} parent=105 // loop_footer
                %s570 = sadd.s32 1, %s566
              $region112: #{tpu_custom_call.1} parent=105 // loop_footer_branch
                %565 = sbr.rel target = $region108
              $region113: #{tpu_custom_call.1} parent=105 // loop_exit
                _
            $region106: #{tpu_custom_call.1} parent=97 // pred_fallthru
              _
          $region98: #{tpu_custom_call.1} parent=93 // pred_fallthru
            _
          %601 = vnop
        $region94: #{tpu_custom_call.1} parent=39 // pred_fallthru
          _
        // Predicated region
        $region129: #{tpu_custom_call.1} parent=39 // pred_check
          %p602 = pneg %p223
        $region130: #{tpu_custom_call.1} parent=39 // pred_check_branch
          %604 = sbr.rel (%p602) target = $region132
        $region131: #{tpu_custom_call.1} parent=39 // pred_region
          %s605 = smul.addr %s27, 8
          %s606 = sadd.s32 %s28, %s605
          %s607 = smul.addr %s606, 8
          %s608 = scalar_lea.vmem %s7, %s607
          // Predicated region
          $region133: #{tpu_custom_call.1} parent=131 // pred_check
            _
          $region134: #{tpu_custom_call.1} parent=131 // pred_check_branch
            %610 = sbr.rel (0) target = $region136
          $region135: #{tpu_custom_call.1} parent=131 // pred_region
            // Predicated region
            $region137: #{tpu_custom_call.1} parent=135 // pred_check
              _
            $region138: #{tpu_custom_call.1} parent=135 // pred_check_branch
              %612 = sbr.rel (0) target = $region140
            $region139: #{tpu_custom_call.1} parent=135 // pred_region
              // Predicated region
              $region152: #{tpu_custom_call.1} parent=139 // pred_check
                _
              $region153: #{tpu_custom_call.1} parent=139 // pred_check_branch
                %634 = sbr.rel (0) target = $region155
              $region154: #{tpu_custom_call.1} parent=139 // pred_region
                loop: start=0, step=1, limit=1
                $region156: #{tpu_custom_call.1} parent=154 // loop_pre_header
                  _
                $region157: #{tpu_custom_call.1} parent=154 // loop_header
                  %s636 = sphi 0, %s640
                  %p637 = scmp.ge.s32.totalorder %s636, 1
                  %s641 = sphi %s497, %s497
                  %s642 = sphi %s608, %s608
                $region158: #{tpu_custom_call.1} parent=154 // loop_header_branch
                  %639 = sbr.rel (%p637) target = $region162
                $region159: #{tpu_custom_call.1} parent=154 // loop_body
                  %v643 = vld [vmem:[%s641] sm:$0xff]
                  %644 = vst [vmem:[%s642] sm:$0xff] %v643
                  %v645 = vld [vmem:[%s641 + $0x8] sm:$0xff]
                  %646 = vst [vmem:[%s642 + $0x10] sm:$0xff] %v645
                  %v647 = vld [vmem:[%s641 + $0x10] sm:$0xff]
                  %648 = vst [vmem:[%s642 + $0x20] sm:$0xff] %v647
                  %v649 = vld [vmem:[%s641 + $0x18] sm:$0xff]
                  %650 = vst [vmem:[%s642 + $0x30] sm:$0xff] %v649
                $region160: #{tpu_custom_call.1} parent=154 // loop_footer
                  %s640 = sadd.s32 1, %s636
                $region161: #{tpu_custom_call.1} parent=154 // loop_footer_branch
                  %635 = sbr.rel target = $region157
                $region162: #{tpu_custom_call.1} parent=154 // loop_exit
                  _
              $region155: #{tpu_custom_call.1} parent=139 // pred_fallthru
                _
              // Predicated region
              $region163: #{tpu_custom_call.1} parent=139 // pred_check
                _
              $region164: #{tpu_custom_call.1} parent=139 // pred_check_branch
                %652 = sbr.rel target = $region166
              $region165: #{tpu_custom_call.1} parent=139 // pred_region
                _
              $region166: #{tpu_custom_call.1} parent=139 // pred_fallthru
                _
            $region140: #{tpu_custom_call.1} parent=135 // pred_fallthru
              _
            // Predicated region
            $region141: #{tpu_custom_call.1} parent=135 // pred_check
              _
            $region142: #{tpu_custom_call.1} parent=135 // pred_check_branch
              %614 = sbr.rel target = $region144
            $region143: #{tpu_custom_call.1} parent=135 // pred_region
              %s616 = ssub.s32 256, 1
              loop: start=0, step=1, limit=1
              $region145: #{tpu_custom_call.1} parent=143 // loop_pre_header
                _
              $region146: #{tpu_custom_call.1} parent=143 // loop_header
                %s618 = sphi 0, %s622
                %p619 = scmp.ge.s32.totalorder %s618, 1
                %s623 = sphi %s497, %s497
                %s624 = sphi %s608, %s608
              $region147: #{tpu_custom_call.1} parent=143 // loop_header_branch
                %621 = sbr.rel (%p619) target = $region151
              $region148: #{tpu_custom_call.1} parent=143 // loop_body
                %v625 = vld [vmem:[%s623] sm:%s616]
                %626 = vst [vmem:[%s624] sm:%s616] %v625
                %v627 = vld [vmem:[%s623 + $0x8] sm:%s616]
                %628 = vst [vmem:[%s624 + $0x10] sm:%s616] %v627
                %v629 = vld [vmem:[%s623 + $0x10] sm:%s616]
                %630 = vst [vmem:[%s624 + $0x20] sm:%s616] %v629
                %v631 = vld [vmem:[%s623 + $0x18] sm:%s616]
                %632 = vst [vmem:[%s624 + $0x30] sm:%s616] %v631
              $region149: #{tpu_custom_call.1} parent=143 // loop_footer
                %s622 = sadd.s32 1, %s618
              $region150: #{tpu_custom_call.1} parent=143 // loop_footer_branch
                %617 = sbr.rel target = $region146
              $region151: #{tpu_custom_call.1} parent=143 // loop_exit
                _
            $region144: #{tpu_custom_call.1} parent=135 // pred_fallthru
              _
          $region136: #{tpu_custom_call.1} parent=131 // pred_fallthru
            _
          %653 = vnop
        $region132: #{tpu_custom_call.1} parent=39 // pred_fallthru
          _
      $region40: #{tpu_custom_call.1} parent=5 // pred_fallthru
        _
      %p654 = scmp.le.s32.totalorder 2, %s18
      // Predicated region
      $region167: #{tpu_custom_call.1} parent=5 // pred_check
        %p655 = pneg %p654
      $region168: #{tpu_custom_call.1} parent=5 // pred_check_branch
        %657 = sbr.rel (%p655) target = $region170
      $region169: #{tpu_custom_call.1} parent=5 // pred_region
        %s658 = ssub.s32 %s18, 2
        // Predicated region
        $region171: #{tpu_custom_call.1} parent=169 // pred_check
          %p659 = pneg %p173
        $region172: #{tpu_custom_call.1} parent=169 // pred_check_branch
          %661 = sbr.rel (%p659) target = $region174
        $region173: #{tpu_custom_call.1} parent=169 // pred_region
          %s662 = sand.u32 %s158, 1
          %s663 = sand.u32 %s158, 1
          %s664 = smul.addr %s663, 32
          %s665 = scalar_lea.vmem [#allocation7], %s664
        $region174: #{tpu_custom_call.1} parent=169 // pred_fallthru
          _
        // Predicated region
        $region175: #{tpu_custom_call.1} parent=169 // pred_check
          %p666 = pneg %p201
        $region176: #{tpu_custom_call.1} parent=169 // pred_check_branch
          %668 = sbr.rel (%p666) target = $region178
        $region177: #{tpu_custom_call.1} parent=169 // pred_region
          %s669 = sand.u32 %s186, 1
          %s670 = sand.u32 %s186, 1
          %s671 = smul.addr %s670, 32
          %s672 = scalar_lea.vmem [#allocation8], %s671
        $region178: #{tpu_custom_call.1} parent=169 // pred_fallthru
          _
        // Predicated region
        $region179: #{tpu_custom_call.1} parent=169 // pred_check
          %p673 = pneg %p229
        $region180: #{tpu_custom_call.1} parent=169 // pred_check_branch
          %675 = sbr.rel (%p673) target = $region182
        $region181: #{tpu_custom_call.1} parent=169 // pred_region
          %s676 = sand.u32 %s214, 1
          %s677 = sand.u32 %s214, 1
          %s678 = smul.addr %s677, 32
          %s679 = scalar_lea.vmem [#allocation9], %s678
        $region182: #{tpu_custom_call.1} parent=169 // pred_fallthru
          _
      $region170: #{tpu_custom_call.1} parent=5 // pred_fallthru
        _
    $region6: #{tpu_custom_call.1} parent=1 // loop_footer
      %s22 = sadd.s32 1, %s18
    $region7: #{tpu_custom_call.1} parent=1 // loop_footer_branch
      %17 = sbr.rel target = $region3
    $region8: #{tpu_custom_call.1} parent=1 // loop_exit
      _
    %680 = vsyncpa [#allocation3], 1
    %s681 = scalar_lea.sflag [#allocation3], 1
    %682 = vsyncpa %s681, 1
    %683 = vsyncpa [#allocation5], 1

</llo_original>
